<compile_context>
chip_gen: v5e
topology: v5e:2x2
jax: 0.10.0
libtpu: 0.0.40
codegen_flags: <defaults>
</compile_context>

<pallas_src>
import jax
import jax.numpy as jnp
from jax.experimental import pallas as pl
from jax.experimental.pallas import tpu as pltpu


def _rev_matrix(n, dtype):
    """Anti-diagonal (reversal) permutation matrix of size (n, n)."""
    idx = jnp.arange(n)
    return (idx[:, None] + idx[None, :] == n - 1).astype(dtype)


def _tpu_defaults():
    """(physical VMEM bytes, MXU dim) with conservative fallbacks."""
    phys_vmem = 64 << 20      # conservative (v7x-class) fallback
    mxu_dim = 256
    try:
        info = pltpu.get_tpu_info()
        phys_vmem = int(getattr(info, "vmem_capacity_bytes", phys_vmem))
    except Exception:
        pass
    try:
        kind = jax.devices()[0].device_kind.lower()
        if any(v in kind for v in ("v2", "v3", "v4", "v5")):
            mxu_dim = 128     # 128x128 MXUs on v5-class and earlier
    except Exception:
        pass
    return phys_vmem, mxu_dim


def _largest_divisor_tile(dim, unit, max_tile):
    """Largest divisor of `dim` that is a multiple of `unit` and <= max_tile.

    Falls back to `dim` itself (whole axis) if no such divisor exists.
    """
    best = None
    t = unit
    limit = min(dim, max_tile)
    while t <= limit:
        if dim % t == 0:
            best = t
        t += unit
    return best if best is not None else dim


def _flip_kernel(hflip_ref, vflip_ref, jw_ref, ph_ref,
                 in_ref, tgt_ref, out_in_ref, out_tgt_ref):
    b = pl.program_id(0)
    hf = hflip_ref[b] != 0          # horizontal flip this sample?
    vf = vflip_ref[b] != 0          # vertical   flip this sample?
    nh = jnp.logical_not(hf)
    nv = jnp.logical_not(vf)

    C, TH, TW = in_ref.shape
    mm_dtype = jw_ref.dtype

    def process(src_ref, dst_ref):
        @pl.when(nh & nv)
        def _():                    # common path: plain copy, no matmul, no cast
            dst_ref[...] = src_ref[...]

        @pl.when(hf & nv)
        def _():                    # lane reversal within the W tile (one big matmul)
            x = src_ref[...].astype(mm_dtype).reshape(C * TH, TW)
            y = jnp.dot(x, jw_ref[...], preferred_element_type=jnp.float32)
            dst_ref[...] = y.astype(dst_ref.dtype).reshape(C, TH, TW)

        @pl.when(nh & vf)
        def _():                    # sublane reversal within the H tile, per channel
            x = src_ref[...].astype(mm_dtype)
            for c in range(C):
                y = jnp.dot(ph_ref[...], x[c],
                            preferred_element_type=jnp.float32)
                dst_ref[c] = y.astype(dst_ref.dtype)

        @pl.when(hf & vf)
        def _():                    # both flips; keep intermediate in f32, cast once
            x = src_ref[...].astype(mm_dtype)
            jw_f32 = jw_ref[...].astype(jnp.float32)
            for c in range(C):
                y = jnp.dot(ph_ref[...], x[c],
                            preferred_element_type=jnp.float32)
                y = jnp.dot(y, jw_f32, preferred_element_type=jnp.float32)
                dst_ref[c] = y.astype(dst_ref.dtype)

    process(in_ref, out_in_ref)
    process(tgt_ref, out_tgt_ref)


def data_augmentation(inputs, targets, hflip_flags, vflip_flags, *,
                      tile_h=None, tile_w=None):
    """Apply the same per-sample horizontal/vertical flips to inputs & targets."""
    B, C, H, W = inputs.shape
    assert targets.shape == inputs.shape, "inputs/targets must share a shape"
    assert targets.dtype == inputs.dtype, "inputs/targets must share a dtype"
    assert hflip_flags.shape == (B,) and vflip_flags.shape == (B,), \
        "flip flag arrays must have exactly one entry per sample"

    dtype = inputs.dtype
    itemsize = jnp.dtype(dtype).itemsize
    phys_vmem, mxu_dim = _tpu_defaults()

    # --- lane (W) tiling: cross-tile hflip handled by the output index_map ---
    if tile_w is None:
        if W % 128 != 0:
            tile_w = W                       # narrow/odd W: keep lane dim whole
        elif W % mxu_dim == 0:
            tile_w = min(W, mxu_dim)         # 128 on v5-class, 256 on v6e/v7x
        else:
            tile_w = 128
    assert W % tile_w == 0 and (tile_w % 128 == 0 or tile_w == W)
    n_w = W // tile_w

    # --- sublane (H) tiling: cross-tile vflip handled by the output index_map ---
    if tile_h is None:
        slab_budget = phys_vmem * 3 // 8     # total for 4 streams x 2 buffers
        per_slab = min(slab_budget // 8, 4 << 20)
        max_th = max(8, per_slab // max(1, C * tile_w * itemsize))
        tile_h = _largest_divisor_tile(H, 8, max_th)
    assert H % tile_h == 0 and (tile_h % 8 == 0 or tile_h == H)
    n_h = H // tile_h

    # Matmul dtype for the permutation flips (a permutation matmul only moves data,
    # so it is exact).
    if jnp.issubdtype(dtype, jnp.floating):
        mm_dtype = dtype
    else:
        # TODO(synk): for 8-bit images use bfloat16 here (faster, still exact);
        # f32 keeps exactness for wider integer types and avoids int-MXU on v7x.
        mm_dtype = jnp.float32

    jw = _rev_matrix(tile_w, mm_dtype)       # lane reversal within a W tile
    ph = _rev_matrix(tile_h, mm_dtype)       # sublane reversal within an H tile

    # inputs/targets: one (C, tile_h, tile_w) slab per step (batch dim squeezed).
    in_spec = pl.BlockSpec((None, C, tile_h, tile_w),
                           lambda b, h, w, hfl, vfl: (b, 0, h, w))
    # Cross-tile flips happen HERE: the output slab index along H (resp. W) is
    # reversed when this sample's vflip (resp. hflip) flag is set.
    out_spec = pl.BlockSpec(
        (None, C, tile_h, tile_w),
        lambda b, h, w, hfl, vfl: (
            b, 0,
            jnp.where(vfl[b] != 0, n_h - 1 - h, h),
            jnp.where(hfl[b] != 0, n_w - 1 - w, w)))
    # Shared permutation matrices: constant block index -> not re-fetched per step.
    jw_spec = pl.BlockSpec((tile_w, tile_w), lambda b, h, w, hfl, vfl: (0, 0))
    ph_spec = pl.BlockSpec((tile_h, tile_h), lambda b, h, w, hfl, vfl: (0, 0))

    grid_spec = pltpu.PrefetchScalarGridSpec(
        num_scalar_prefetch=2,               # hflip_flags, vflip_flags -> SMEM
        grid=(B, n_h, n_w),
        in_specs=[jw_spec, ph_spec, in_spec, in_spec],
        out_specs=[out_spec, out_spec],
    )

    vmem_limit = int(min(phys_vmem * 3 // 4, 112 << 20))

    return pl.pallas_call(
        _flip_kernel,
        out_shape=(jax.ShapeDtypeStruct(inputs.shape, inputs.dtype),
                   jax.ShapeDtypeStruct(targets.shape, targets.dtype)),
        grid_spec=grid_spec,
        compiler_params=pltpu.CompilerParams(
            dimension_semantics=("parallel", "parallel", "arbitrary"),
            vmem_limit_bytes=vmem_limit),
    )(hflip_flags, vflip_flags, jw, ph, inputs, targets)


if __name__ == "__main__":
    key = jax.random.PRNGKey(0)
    k_in, k_tgt, k_h, k_v, k_in2, k_tgt2 = jax.random.split(key, 6)

    # Pure-JAX reference (same semantics as kornia flips with shared params).
    def ref(x, hfl, vfl):
        x = jnp.where(hfl[:, None, None, None] != 0, jnp.flip(x, axis=-1), x)
        x = jnp.where(vfl[:, None, None, None] != 0, jnp.flip(x, axis=-2), x)
        return x

    # ---------------- Test 1: sampled flags (kornia semantics) ----------------
    B, C, H, W = 4, 4, 16, 16
    inputs = jax.random.normal(k_in, (B, C, H, W), dtype=jnp.float32)
    targets = jax.random.normal(k_tgt, (B, C, H, W), dtype=jnp.float32)
    # Per-sample Bernoulli(0.25) flip decisions, sampled deterministically here
    # (these are the module's only "parameters").
    hflip_flags = (jax.random.uniform(k_h, (B,)) < 0.25).astype(jnp.int32)
    vflip_flags = (jax.random.uniform(k_v, (B,)) < 0.25).astype(jnp.int32)
    out_in, out_tgt = data_augmentation(inputs, targets,
                                        hflip_flags, vflip_flags, tile_h=8)
    jax.block_until_ready((out_in, out_tgt))
    assert jnp.allclose(out_in, ref(inputs, hflip_flags, vflip_flags), atol=1e-6)
    assert jnp.allclose(out_tgt, ref(targets, hflip_flags, vflip_flags), atol=1e-6)

    # ---------------- Test 2: all four (hflip, vflip) combinations ------------
    hforce = jnp.array([0, 1, 0, 1], dtype=jnp.int32)
    vforce = jnp.array([0, 0, 1, 1], dtype=jnp.int32)
    f_in, f_tgt = data_augmentation(inputs, targets, hforce, vforce, tile_h=8)
    jax.block_until_ready((f_in, f_tgt))
    assert jnp.allclose(f_in, ref(inputs, hforce, vforce), atol=1e-6)
    assert jnp.allclose(f_tgt, ref(targets, hforce, vforce), atol=1e-6)

    # ---------------- Test 3: default tiling heuristic --------------------------
    d_in, d_tgt = data_augmentation(inputs, targets, hforce, vforce)
    jax.block_until_ready((d_in, d_tgt))
    assert jnp.allclose(d_in, ref(inputs, hforce, vforce), atol=1e-6)
    assert jnp.allclose(d_tgt, ref(targets, hforce, vforce), atol=1e-6)

    # ---------------- Test 4: cross-tile hflip AND vflip (tiled W) --------------
    B2, C2, H2, W2 = 4, 3, 16, 256
    inputs2 = jax.random.normal(k_in2, (B2, C2, H2, W2), dtype=jnp.float32)
    targets2 = jax.random.normal(k_tgt2, (B2, C2, H2, W2), dtype=jnp.float32)
    g_in, g_tgt = data_augmentation(inputs2, targets2, hforce, vforce,
                                    tile_h=8, tile_w=128)
    jax.block_until_ready((g_in, g_tgt))
    assert jnp.allclose(g_in, ref(inputs2, hforce, vforce), atol=1e-6)
    assert jnp.allclose(g_tgt, ref(targets2, hforce, vforce), atol=1e-6)

    print("KERNEL_OK")
</pallas_src>

<mosaic_0001>
module attributes {stable_mosaic.version = 11 : i64} {
  func.func @_flip_kernel(%arg0: i32, %arg1: i32, %arg2: i32, %arg3: memref<4xi32, #tpu.memory_space<smem>>, %arg4: memref<4xi32, #tpu.memory_space<smem>>, %arg5: memref<16x16xf32, #tpu.memory_space<vmem>>, %arg6: memref<8x8xf32, #tpu.memory_space<vmem>>, %arg7: memref<1x4x8x16xf32, #tpu.memory_space<vmem>>, %arg8: memref<1x4x8x16xf32, #tpu.memory_space<vmem>>, %arg9: memref<1x4x8x16xf32, #tpu.memory_space<vmem>>, %arg10: memref<1x4x8x16xf32, #tpu.memory_space<vmem>>) attributes {dimension_semantics = [#tpu.dimension_semantics<parallel>, #tpu.dimension_semantics<parallel>, #tpu.dimension_semantics<arbitrary>], iteration_bounds = array<i64: 4, 2, 1>, scalar_prefetch = 2 : i64, scratch_operands = 0 : i64, tpu.core_type = #tpu.core_type<tc>, window_params = [{pipeline_mode = #tpu.pipeline_mode<synchronous>, transform_indices = @transform_0, window_bounds = array<i64: 16, 16>}, {pipeline_mode = #tpu.pipeline_mode<synchronous>, transform_indices = @transform_1, window_bounds = array<i64: 8, 8>}, {transform_indices = @transform_2, window_bounds = array<i64: 1, 4, 8, 16>}, {transform_indices = @transform_3, window_bounds = array<i64: 1, 4, 8, 16>}, {transform_indices = @transform_4, window_bounds = array<i64: 1, 4, 8, 16>}, {transform_indices = @transform_5, window_bounds = array<i64: 1, 4, 8, 16>}]} {
    %0 = arith.index_cast %arg0 : i32 to index
    %1 = memref.load %arg3[%0] : memref<4xi32, #tpu.memory_space<smem>>
    %c0_i32 = arith.constant 0 : i32
    %2 = arith.cmpi ne, %1, %c0_i32 : i32
    %3 = arith.index_cast %arg0 : i32 to index
    %4 = memref.load %arg4[%3] : memref<4xi32, #tpu.memory_space<smem>>
    %c0_i32_0 = arith.constant 0 : i32
    %5 = arith.cmpi ne, %4, %c0_i32_0 : i32
    %true = arith.constant true
    %6 = arith.xori %2, %true : i1
    %true_1 = arith.constant true
    %7 = arith.xori %5, %true_1 : i1
    %8 = arith.andi %6, %7 : i1
    %9 = arith.extui %8 : i1 to i32
    %c0_i32_2 = arith.constant 0 : i32
    %10 = arith.cmpi ne, %9, %c0_i32_2 : i32
    scf.if %10 {
      %c0 = arith.constant 0 : index
      %c0_10 = arith.constant 0 : index
      %c0_11 = arith.constant 0 : index
      %c0_12 = arith.constant 0 : index
      %32 = vector.load %arg7[%c0, %c0_10, %c0_11, %c0_12] : memref<1x4x8x16xf32, #tpu.memory_space<vmem>>, vector<1x4x8x16xf32>
      %33 = vector.shape_cast %32 : vector<1x4x8x16xf32> to vector<4x8x16xf32>
      %c0_13 = arith.constant 0 : index
      %c0_14 = arith.constant 0 : index
      %c0_15 = arith.constant 0 : index
      %c0_16 = arith.constant 0 : index
      %34 = vector.load %arg9[%c0_13, %c0_14, %c0_15, %c0_16] : memref<1x4x8x16xf32, #tpu.memory_space<vmem>>, vector<1x4x8x16xf32>
      %35 = vector.shape_cast %34 : vector<1x4x8x16xf32> to vector<4x8x16xf32>
      %36 = vector.shape_cast %33 : vector<4x8x16xf32> to vector<1x4x8x16xf32>
      tpu.vector_store %arg9[%c0_13, %c0_14, %c0_15, %c0_16], %36 {strides = array<i32>} : memref<1x4x8x16xf32, #tpu.memory_space<vmem>>, vector<1x4x8x16xf32>,
    } else {
    }
    %11 = arith.andi %2, %7 : i1
    %12 = arith.extui %11 : i1 to i32
    %c0_i32_3 = arith.constant 0 : i32
    %13 = arith.cmpi ne, %12, %c0_i32_3 : i32
    scf.if %13 {
      %c0 = arith.constant 0 : index
      %c0_10 = arith.constant 0 : index
      %c0_11 = arith.constant 0 : index
      %c0_12 = arith.constant 0 : index
      %32 = vector.load %arg7[%c0, %c0_10, %c0_11, %c0_12] : memref<1x4x8x16xf32, #tpu.memory_space<vmem>>, vector<1x4x8x16xf32>
      %33 = vector.shape_cast %32 : vector<1x4x8x16xf32> to vector<4x8x16xf32>
      %34 = vector.shape_cast %33 : vector<4x8x16xf32> to vector<32x16xf32>
      %c0_13 = arith.constant 0 : index
      %c0_14 = arith.constant 0 : index
      %35 = vector.load %arg5[%c0_13, %c0_14] : memref<16x16xf32, #tpu.memory_space<vmem>>, vector<16x16xf32>
      %cst = arith.constant dense<0.000000e+00> : vector<32x16xf32>
      %36 = tpu.matmul %34, %35, %cst {dimension_numbers = #tpu.dot_dimension_numbers<[1], [0], [0], [1], [0, 0, 1, 1], [], []>} : vector<32x16xf32>, vector<16x16xf32>, vector<32x16xf32> -> vector<32x16xf32>
      %37 = vector.shape_cast %36 : vector<32x16xf32> to vector<4x8x16xf32>
      %c0_15 = arith.constant 0 : index
      %c0_16 = arith.constant 0 : index
      %c0_17 = arith.constant 0 : index
      %c0_18 = arith.constant 0 : index
      %38 = vector.load %arg9[%c0_15, %c0_16, %c0_17, %c0_18] : memref<1x4x8x16xf32, #tpu.memory_space<vmem>>, vector<1x4x8x16xf32>
      %39 = vector.shape_cast %38 : vector<1x4x8x16xf32> to vector<4x8x16xf32>
      %40 = vector.shape_cast %37 : vector<4x8x16xf32> to vector<1x4x8x16xf32>
      tpu.vector_store %arg9[%c0_15, %c0_16, %c0_17, %c0_18], %40 {strides = array<i32>} : memref<1x4x8x16xf32, #tpu.memory_space<vmem>>, vector<1x4x8x16xf32>,
    } else {
    }
    %14 = arith.andi %6, %5 : i1
    %15 = arith.extui %14 : i1 to i32
    %c0_i32_4 = arith.constant 0 : i32
    %16 = arith.cmpi ne, %15, %c0_i32_4 : i32
    scf.if %16 {
      %c0 = arith.constant 0 : index
      %c0_10 = arith.constant 0 : index
      %c0_11 = arith.constant 0 : index
      %c0_12 = arith.constant 0 : index
      %32 = vector.load %arg7[%c0, %c0_10, %c0_11, %c0_12] : memref<1x4x8x16xf32, #tpu.memory_space<vmem>>, vector<1x4x8x16xf32>
      %33 = vector.shape_cast %32 : vector<1x4x8x16xf32> to vector<4x8x16xf32>
      %c0_13 = arith.constant 0 : index
      %c0_14 = arith.constant 0 : index
      %34 = vector.load %arg6[%c0_13, %c0_14] : memref<8x8xf32, #tpu.memory_space<vmem>>, vector<8x8xf32>
      %35 = vector.extract_strided_slice %33 {offsets = [0, 0, 0], sizes = [1, 8, 16], strides = [1, 1, 1]} : vector<4x8x16xf32> to vector<1x8x16xf32>
      %36 = vector.shape_cast %35 : vector<1x8x16xf32> to vector<8x16xf32>
      %cst = arith.constant dense<0.000000e+00> : vector<8x16xf32>
      %37 = tpu.matmul %34, %36, %cst {dimension_numbers = #tpu.dot_dimension_numbers<[1], [0], [0], [1], [0, 0, 1, 1], [], []>} : vector<8x8xf32>, vector<8x16xf32>, vector<8x16xf32> -> vector<8x16xf32>
      %c0_15 = arith.constant 0 : index
      %c0_16 = arith.constant 0 : index
      %c0_17 = arith.constant 0 : index
      %c0_18 = arith.constant 0 : index
      %38 = vector.load %arg9[%c0_15, %c0_16, %c0_17, %c0_18] : memref<1x4x8x16xf32, #tpu.memory_space<vmem>>, vector<1x1x8x16xf32>
      %39 = vector.shape_cast %38 : vector<1x1x8x16xf32> to vector<8x16xf32>
      %40 = vector.shape_cast %37 : vector<8x16xf32> to vector<1x1x8x16xf32>
      tpu.vector_store %arg9[%c0_15, %c0_16, %c0_17, %c0_18], %40 {strides = array<i32>} : memref<1x4x8x16xf32, #tpu.memory_space<vmem>>, vector<1x1x8x16xf32>,
      %c0_19 = arith.constant 0 : index
      %c0_20 = arith.constant 0 : index
      %41 = vector.load %arg6[%c0_19, %c0_20] : memref<8x8xf32, #tpu.memory_space<vmem>>, vector<8x8xf32>
      %42 = vector.extract_strided_slice %33 {offsets = [1, 0, 0], sizes = [1, 8, 16], strides = [1, 1, 1]} : vector<4x8x16xf32> to vector<1x8x16xf32>
      %43 = vector.shape_cast %42 : vector<1x8x16xf32> to vector<8x16xf32>
      %cst_21 = arith.constant dense<0.000000e+00> : vector<8x16xf32>
      %44 = tpu.matmul %41, %43, %cst_21 {dimension_numbers = #tpu.dot_dimension_numbers<[1], [0], [0], [1], [0, 0, 1, 1], [], []>} : vector<8x8xf32>, vector<8x16xf32>, vector<8x16xf32> -> vector<8x16xf32>
      %c0_22 = arith.constant 0 : index
      %c1 = arith.constant 1 : index
      %c0_23 = arith.constant 0 : index
      %c0_24 = arith.constant 0 : index
      %45 = vector.load %arg9[%c0_22, %c1, %c0_23, %c0_24] : memref<1x4x8x16xf32, #tpu.memory_space<vmem>>, vector<1x1x8x16xf32>
      %46 = vector.shape_cast %45 : vector<1x1x8x16xf32> to vector<8x16xf32>
      %47 = vector.shape_cast %44 : vector<8x16xf32> to vector<1x1x8x16xf32>
      tpu.vector_store %arg9[%c0_22, %c1, %c0_23, %c0_24], %47 {strides = array<i32>} : memref<1x4x8x16xf32, #tpu.memory_space<vmem>>, vector<1x1x8x16xf32>,
      %c0_25 = arith.constant 0 : index
      %c0_26 = arith.constant 0 : index
      %48 = vector.load %arg6[%c0_25, %c0_26] : memref<8x8xf32, #tpu.memory_space<vmem>>, vector<8x8xf32>
      %49 = vector.extract_strided_slice %33 {offsets = [2, 0, 0], sizes = [1, 8, 16], strides = [1, 1, 1]} : vector<4x8x16xf32> to vector<1x8x16xf32>
      %50 = vector.shape_cast %49 : vector<1x8x16xf32> to vector<8x16xf32>
      %cst_27 = arith.constant dense<0.000000e+00> : vector<8x16xf32>
      %51 = tpu.matmul %48, %50, %cst_27 {dimension_numbers = #tpu.dot_dimension_numbers<[1], [0], [0], [1], [0, 0, 1, 1], [], []>} : vector<8x8xf32>, vector<8x16xf32>, vector<8x16xf32> -> vector<8x16xf32>
      %c0_28 = arith.constant 0 : index
      %c2 = arith.constant 2 : index
      %c0_29 = arith.constant 0 : index
      %c0_30 = arith.constant 0 : index
      %52 = vector.load %arg9[%c0_28, %c2, %c0_29, %c0_30] : memref<1x4x8x16xf32, #tpu.memory_space<vmem>>, vector<1x1x8x16xf32>
      %53 = vector.shape_cast %52 : vector<1x1x8x16xf32> to vector<8x16xf32>
      %54 = vector.shape_cast %51 : vector<8x16xf32> to vector<1x1x8x16xf32>
      tpu.vector_store %arg9[%c0_28, %c2, %c0_29, %c0_30], %54 {strides = array<i32>} : memref<1x4x8x16xf32, #tpu.memory_space<vmem>>, vector<1x1x8x16xf32>,
      %c0_31 = arith.constant 0 : index
      %c0_32 = arith.constant 0 : index
      %55 = vector.load %arg6[%c0_31, %c0_32] : memref<8x8xf32, #tpu.memory_space<vmem>>, vector<8x8xf32>
      %56 = vector.extract_strided_slice %33 {offsets = [3, 0, 0], sizes = [1, 8, 16], strides = [1, 1, 1]} : vector<4x8x16xf32> to vector<1x8x16xf32>
      %57 = vector.shape_cast %56 : vector<1x8x16xf32> to vector<8x16xf32>
      %cst_33 = arith.constant dense<0.000000e+00> : vector<8x16xf32>
      %58 = tpu.matmul %55, %57, %cst_33 {dimension_numbers = #tpu.dot_dimension_numbers<[1], [0], [0], [1], [0, 0, 1, 1], [], []>} : vector<8x8xf32>, vector<8x16xf32>, vector<8x16xf32> -> vector<8x16xf32>
      %c0_34 = arith.constant 0 : index
      %c3 = arith.constant 3 : index
      %c0_35 = arith.constant 0 : index
      %c0_36 = arith.constant 0 : index
      %59 = vector.load %arg9[%c0_34, %c3, %c0_35, %c0_36] : memref<1x4x8x16xf32, #tpu.memory_space<vmem>>, vector<1x1x8x16xf32>
      %60 = vector.shape_cast %59 : vector<1x1x8x16xf32> to vector<8x16xf32>
      %61 = vector.shape_cast %58 : vector<8x16xf32> to vector<1x1x8x16xf32>
      tpu.vector_store %arg9[%c0_34, %c3, %c0_35, %c0_36], %61 {strides = array<i32>} : memref<1x4x8x16xf32, #tpu.memory_space<vmem>>, vector<1x1x8x16xf32>,
    } else {
    }
    %17 = arith.andi %2, %5 : i1
    %18 = arith.extui %17 : i1 to i32
    %c0_i32_5 = arith.constant 0 : i32
    %19 = arith.cmpi ne, %18, %c0_i32_5 : i32
    scf.if %19 {
      %c0 = arith.constant 0 : index
      %c0_10 = arith.constant 0 : index
      %c0_11 = arith.constant 0 : index
      %c0_12 = arith.constant 0 : index
      %32 = vector.load %arg7[%c0, %c0_10, %c0_11, %c0_12] : memref<1x4x8x16xf32, #tpu.memory_space<vmem>>, vector<1x4x8x16xf32>
      %33 = vector.shape_cast %32 : vector<1x4x8x16xf32> to vector<4x8x16xf32>
      %c0_13 = arith.constant 0 : index
      %c0_14 = arith.constant 0 : index
      %34 = vector.load %arg5[%c0_13, %c0_14] : memref<16x16xf32, #tpu.memory_space<vmem>>, vector<16x16xf32>
      %c0_15 = arith.constant 0 : index
      %c0_16 = arith.constant 0 : index
      %35 = vector.load %arg6[%c0_15, %c0_16] : memref<8x8xf32, #tpu.memory_space<vmem>>, vector<8x8xf32>
      %36 = vector.extract_strided_slice %33 {offsets = [0, 0, 0], sizes = [1, 8, 16], strides = [1, 1, 1]} : vector<4x8x16xf32> to vector<1x8x16xf32>
      %37 = vector.shape_cast %36 : vector<1x8x16xf32> to vector<8x16xf32>
      %cst = arith.constant dense<0.000000e+00> : vector<8x16xf32>
      %38 = tpu.matmul %35, %37, %cst {dimension_numbers = #tpu.dot_dimension_numbers<[1], [0], [0], [1], [0, 0, 1, 1], [], []>} : vector<8x8xf32>, vector<8x16xf32>, vector<8x16xf32> -> vector<8x16xf32>
      %cst_17 = arith.constant dense<0.000000e+00> : vector<8x16xf32>
      %39 = tpu.matmul %38, %34, %cst_17 {dimension_numbers = #tpu.dot_dimension_numbers<[1], [0], [0], [1], [0, 0, 1, 1], [], []>} : vector<8x16xf32>, vector<16x16xf32>, vector<8x16xf32> -> vector<8x16xf32>
      %c0_18 = arith.constant 0 : index
      %c0_19 = arith.constant 0 : index
      %c0_20 = arith.constant 0 : index
      %c0_21 = arith.constant 0 : index
      %40 = vector.load %arg9[%c0_18, %c0_19, %c0_20, %c0_21] : memref<1x4x8x16xf32, #tpu.memory_space<vmem>>, vector<1x1x8x16xf32>
      %41 = vector.shape_cast %40 : vector<1x1x8x16xf32> to vector<8x16xf32>
      %42 = vector.shape_cast %39 : vector<8x16xf32> to vector<1x1x8x16xf32>
      tpu.vector_store %arg9[%c0_18, %c0_19, %c0_20, %c0_21], %42 {strides = array<i32>} : memref<1x4x8x16xf32, #tpu.memory_space<vmem>>, vector<1x1x8x16xf32>,
      %c0_22 = arith.constant 0 : index
      %c0_23 = arith.constant 0 : index
      %43 = vector.load %arg6[%c0_22, %c0_23] : memref<8x8xf32, #tpu.memory_space<vmem>>, vector<8x8xf32>
      %44 = vector.extract_strided_slice %33 {offsets = [1, 0, 0], sizes = [1, 8, 16], strides = [1, 1, 1]} : vector<4x8x16xf32> to vector<1x8x16xf32>
      %45 = vector.shape_cast %44 : vector<1x8x16xf32> to vector<8x16xf32>
      %cst_24 = arith.constant dense<0.000000e+00> : vector<8x16xf32>
      %46 = tpu.matmul %43, %45, %cst_24 {dimension_numbers = #tpu.dot_dimension_numbers<[1], [0], [0], [1], [0, 0, 1, 1], [], []>} : vector<8x8xf32>, vector<8x16xf32>, vector<8x16xf32> -> vector<8x16xf32>
      %cst_25 = arith.constant dense<0.000000e+00> : vector<8x16xf32>
      %47 = tpu.matmul %46, %34, %cst_25 {dimension_numbers = #tpu.dot_dimension_numbers<[1], [0], [0], [1], [0, 0, 1, 1], [], []>} : vector<8x16xf32>, vector<16x16xf32>, vector<8x16xf32> -> vector<8x16xf32>
      %c0_26 = arith.constant 0 : index
      %c1 = arith.constant 1 : index
      %c0_27 = arith.constant 0 : index
      %c0_28 = arith.constant 0 : index
      %48 = vector.load %arg9[%c0_26, %c1, %c0_27, %c0_28] : memref<1x4x8x16xf32, #tpu.memory_space<vmem>>, vector<1x1x8x16xf32>
      %49 = vector.shape_cast %48 : vector<1x1x8x16xf32> to vector<8x16xf32>
      %50 = vector.shape_cast %47 : vector<8x16xf32> to vector<1x1x8x16xf32>
      tpu.vector_store %arg9[%c0_26, %c1, %c0_27, %c0_28], %50 {strides = array<i32>} : memref<1x4x8x16xf32, #tpu.memory_space<vmem>>, vector<1x1x8x16xf32>,
      %c0_29 = arith.constant 0 : index
      %c0_30 = arith.constant 0 : index
      %51 = vector.load %arg6[%c0_29, %c0_30] : memref<8x8xf32, #tpu.memory_space<vmem>>, vector<8x8xf32>
      %52 = vector.extract_strided_slice %33 {offsets = [2, 0, 0], sizes = [1, 8, 16], strides = [1, 1, 1]} : vector<4x8x16xf32> to vector<1x8x16xf32>
      %53 = vector.shape_cast %52 : vector<1x8x16xf32> to vector<8x16xf32>
      %cst_31 = arith.constant dense<0.000000e+00> : vector<8x16xf32>
      %54 = tpu.matmul %51, %53, %cst_31 {dimension_numbers = #tpu.dot_dimension_numbers<[1], [0], [0], [1], [0, 0, 1, 1], [], []>} : vector<8x8xf32>, vector<8x16xf32>, vector<8x16xf32> -> vector<8x16xf32>
      %cst_32 = arith.constant dense<0.000000e+00> : vector<8x16xf32>
      %55 = tpu.matmul %54, %34, %cst_32 {dimension_numbers = #tpu.dot_dimension_numbers<[1], [0], [0], [1], [0, 0, 1, 1], [], []>} : vector<8x16xf32>, vector<16x16xf32>, vector<8x16xf32> -> vector<8x16xf32>
      %c0_33 = arith.constant 0 : index
      %c2 = arith.constant 2 : index
      %c0_34 = arith.constant 0 : index
      %c0_35 = arith.constant 0 : index
      %56 = vector.load %arg9[%c0_33, %c2, %c0_34, %c0_35] : memref<1x4x8x16xf32, #tpu.memory_space<vmem>>, vector<1x1x8x16xf32>
      %57 = vector.shape_cast %56 : vector<1x1x8x16xf32> to vector<8x16xf32>
      %58 = vector.shape_cast %55 : vector<8x16xf32> to vector<1x1x8x16xf32>
      tpu.vector_store %arg9[%c0_33, %c2, %c0_34, %c0_35], %58 {strides = array<i32>} : memref<1x4x8x16xf32, #tpu.memory_space<vmem>>, vector<1x1x8x16xf32>,
      %c0_36 = arith.constant 0 : index
      %c0_37 = arith.constant 0 : index
      %59 = vector.load %arg6[%c0_36, %c0_37] : memref<8x8xf32, #tpu.memory_space<vmem>>, vector<8x8xf32>
      %60 = vector.extract_strided_slice %33 {offsets = [3, 0, 0], sizes = [1, 8, 16], strides = [1, 1, 1]} : vector<4x8x16xf32> to vector<1x8x16xf32>
      %61 = vector.shape_cast %60 : vector<1x8x16xf32> to vector<8x16xf32>
      %cst_38 = arith.constant dense<0.000000e+00> : vector<8x16xf32>
      %62 = tpu.matmul %59, %61, %cst_38 {dimension_numbers = #tpu.dot_dimension_numbers<[1], [0], [0], [1], [0, 0, 1, 1], [], []>} : vector<8x8xf32>, vector<8x16xf32>, vector<8x16xf32> -> vector<8x16xf32>
      %cst_39 = arith.constant dense<0.000000e+00> : vector<8x16xf32>
      %63 = tpu.matmul %62, %34, %cst_39 {dimension_numbers = #tpu.dot_dimension_numbers<[1], [0], [0], [1], [0, 0, 1, 1], [], []>} : vector<8x16xf32>, vector<16x16xf32>, vector<8x16xf32> -> vector<8x16xf32>
      %c0_40 = arith.constant 0 : index
      %c3 = arith.constant 3 : index
      %c0_41 = arith.constant 0 : index
      %c0_42 = arith.constant 0 : index
      %64 = vector.load %arg9[%c0_40, %c3, %c0_41, %c0_42] : memref<1x4x8x16xf32, #tpu.memory_space<vmem>>, vector<1x1x8x16xf32>
      %65 = vector.shape_cast %64 : vector<1x1x8x16xf32> to vector<8x16xf32>
      %66 = vector.shape_cast %63 : vector<8x16xf32> to vector<1x1x8x16xf32>
      tpu.vector_store %arg9[%c0_40, %c3, %c0_41, %c0_42], %66 {strides = array<i32>} : memref<1x4x8x16xf32, #tpu.memory_space<vmem>>, vector<1x1x8x16xf32>,
    } else {
    }
    %20 = arith.andi %6, %7 : i1
    %21 = arith.extui %20 : i1 to i32
    %c0_i32_6 = arith.constant 0 : i32
    %22 = arith.cmpi ne, %21, %c0_i32_6 : i32
    scf.if %22 {
      %c0 = arith.constant 0 : index
      %c0_10 = arith.constant 0 : index
      %c0_11 = arith.constant 0 : index
      %c0_12 = arith.constant 0 : index
      %32 = vector.load %arg8[%c0, %c0_10, %c0_11, %c0_12] : memref<1x4x8x16xf32, #tpu.memory_space<vmem>>, vector<1x4x8x16xf32>
      %33 = vector.shape_cast %32 : vector<1x4x8x16xf32> to vector<4x8x16xf32>
      %c0_13 = arith.constant 0 : index
      %c0_14 = arith.constant 0 : index
      %c0_15 = arith.constant 0 : index
      %c0_16 = arith.constant 0 : index
      %34 = vector.load %arg10[%c0_13, %c0_14, %c0_15, %c0_16] : memref<1x4x8x16xf32, #tpu.memory_space<vmem>>, vector<1x4x8x16xf32>
      %35 = vector.shape_cast %34 : vector<1x4x8x16xf32> to vector<4x8x16xf32>
      %36 = vector.shape_cast %33 : vector<4x8x16xf32> to vector<1x4x8x16xf32>
      tpu.vector_store %arg10[%c0_13, %c0_14, %c0_15, %c0_16], %36 {strides = array<i32>} : memref<1x4x8x16xf32, #tpu.memory_space<vmem>>, vector<1x4x8x16xf32>,
    } else {
    }
    %23 = arith.andi %2, %7 : i1
    %24 = arith.extui %23 : i1 to i32
    %c0_i32_7 = arith.constant 0 : i32
    %25 = arith.cmpi ne, %24, %c0_i32_7 : i32
    scf.if %25 {
      %c0 = arith.constant 0 : index
      %c0_10 = arith.constant 0 : index
      %c0_11 = arith.constant 0 : index
      %c0_12 = arith.constant 0 : index
      %32 = vector.load %arg8[%c0, %c0_10, %c0_11, %c0_12] : memref<1x4x8x16xf32, #tpu.memory_space<vmem>>, vector<1x4x8x16xf32>
      %33 = vector.shape_cast %32 : vector<1x4x8x16xf32> to vector<4x8x16xf32>
      %34 = vector.shape_cast %33 : vector<4x8x16xf32> to vector<32x16xf32>
      %c0_13 = arith.constant 0 : index
      %c0_14 = arith.constant 0 : index
      %35 = vector.load %arg5[%c0_13, %c0_14] : memref<16x16xf32, #tpu.memory_space<vmem>>, vector<16x16xf32>
      %cst = arith.constant dense<0.000000e+00> : vector<32x16xf32>
      %36 = tpu.matmul %34, %35, %cst {dimension_numbers = #tpu.dot_dimension_numbers<[1], [0], [0], [1], [0, 0, 1, 1], [], []>} : vector<32x16xf32>, vector<16x16xf32>, vector<32x16xf32> -> vector<32x16xf32>
      %37 = vector.shape_cast %36 : vector<32x16xf32> to vector<4x8x16xf32>
      %c0_15 = arith.constant 0 : index
      %c0_16 = arith.constant 0 : index
      %c0_17 = arith.constant 0 : index
      %c0_18 = arith.constant 0 : index
      %38 = vector.load %arg10[%c0_15, %c0_16, %c0_17, %c0_18] : memref<1x4x8x16xf32, #tpu.memory_space<vmem>>, vector<1x4x8x16xf32>
      %39 = vector.shape_cast %38 : vector<1x4x8x16xf32> to vector<4x8x16xf32>
      %40 = vector.shape_cast %37 : vector<4x8x16xf32> to vector<1x4x8x16xf32>
      tpu.vector_store %arg10[%c0_15, %c0_16, %c0_17, %c0_18], %40 {strides = array<i32>} : memref<1x4x8x16xf32, #tpu.memory_space<vmem>>, vector<1x4x8x16xf32>,
    } else {
    }
    %26 = arith.andi %6, %5 : i1
    %27 = arith.extui %26 : i1 to i32
    %c0_i32_8 = arith.constant 0 : i32
    %28 = arith.cmpi ne, %27, %c0_i32_8 : i32
    scf.if %28 {
      %c0 = arith.constant 0 : index
      %c0_10 = arith.constant 0 : index
      %c0_11 = arith.constant 0 : index
      %c0_12 = arith.constant 0 : index
      %32 = vector.load %arg8[%c0, %c0_10, %c0_11, %c0_12] : memref<1x4x8x16xf32, #tpu.memory_space<vmem>>, vector<1x4x8x16xf32>
      %33 = vector.shape_cast %32 : vector<1x4x8x16xf32> to vector<4x8x16xf32>
      %c0_13 = arith.constant 0 : index
      %c0_14 = arith.constant 0 : index
      %34 = vector.load %arg6[%c0_13, %c0_14] : memref<8x8xf32, #tpu.memory_space<vmem>>, vector<8x8xf32>
      %35 = vector.extract_strided_slice %33 {offsets = [0, 0, 0], sizes = [1, 8, 16], strides = [1, 1, 1]} : vector<4x8x16xf32> to vector<1x8x16xf32>
      %36 = vector.shape_cast %35 : vector<1x8x16xf32> to vector<8x16xf32>
      %cst = arith.constant dense<0.000000e+00> : vector<8x16xf32>
      %37 = tpu.matmul %34, %36, %cst {dimension_numbers = #tpu.dot_dimension_numbers<[1], [0], [0], [1], [0, 0, 1, 1], [], []>} : vector<8x8xf32>, vector<8x16xf32>, vector<8x16xf32> -> vector<8x16xf32>
      %c0_15 = arith.constant 0 : index
      %c0_16 = arith.constant 0 : index
      %c0_17 = arith.constant 0 : index
      %c0_18 = arith.constant 0 : index
      %38 = vector.load %arg10[%c0_15, %c0_16, %c0_17, %c0_18] : memref<1x4x8x16xf32, #tpu.memory_space<vmem>>, vector<1x1x8x16xf32>
      %39 = vector.shape_cast %38 : vector<1x1x8x16xf32> to vector<8x16xf32>
      %40 = vector.shape_cast %37 : vector<8x16xf32> to vector<1x1x8x16xf32>
      tpu.vector_store %arg10[%c0_15, %c0_16, %c0_17, %c0_18], %40 {strides = array<i32>} : memref<1x4x8x16xf32, #tpu.memory_space<vmem>>, vector<1x1x8x16xf32>,
      %c0_19 = arith.constant 0 : index
      %c0_20 = arith.constant 0 : index
      %41 = vector.load %arg6[%c0_19, %c0_20] : memref<8x8xf32, #tpu.memory_space<vmem>>, vector<8x8xf32>
      %42 = vector.extract_strided_slice %33 {offsets = [1, 0, 0], sizes = [1, 8, 16], strides = [1, 1, 1]} : vector<4x8x16xf32> to vector<1x8x16xf32>
      %43 = vector.shape_cast %42 : vector<1x8x16xf32> to vector<8x16xf32>
      %cst_21 = arith.constant dense<0.000000e+00> : vector<8x16xf32>
      %44 = tpu.matmul %41, %43, %cst_21 {dimension_numbers = #tpu.dot_dimension_numbers<[1], [0], [0], [1], [0, 0, 1, 1], [], []>} : vector<8x8xf32>, vector<8x16xf32>, vector<8x16xf32> -> vector<8x16xf32>
      %c0_22 = arith.constant 0 : index
      %c1 = arith.constant 1 : index
      %c0_23 = arith.constant 0 : index
      %c0_24 = arith.constant 0 : index
      %45 = vector.load %arg10[%c0_22, %c1, %c0_23, %c0_24] : memref<1x4x8x16xf32, #tpu.memory_space<vmem>>, vector<1x1x8x16xf32>
      %46 = vector.shape_cast %45 : vector<1x1x8x16xf32> to vector<8x16xf32>
      %47 = vector.shape_cast %44 : vector<8x16xf32> to vector<1x1x8x16xf32>
      tpu.vector_store %arg10[%c0_22, %c1, %c0_23, %c0_24], %47 {strides = array<i32>} : memref<1x4x8x16xf32, #tpu.memory_space<vmem>>, vector<1x1x8x16xf32>,
      %c0_25 = arith.constant 0 : index
      %c0_26 = arith.constant 0 : index
      %48 = vector.load %arg6[%c0_25, %c0_26] : memref<8x8xf32, #tpu.memory_space<vmem>>, vector<8x8xf32>
      %49 = vector.extract_strided_slice %33 {offsets = [2, 0, 0], sizes = [1, 8, 16], strides = [1, 1, 1]} : vector<4x8x16xf32> to vector<1x8x16xf32>
      %50 = vector.shape_cast %49 : vector<1x8x16xf32> to vector<8x16xf32>
      %cst_27 = arith.constant dense<0.000000e+00> : vector<8x16xf32>
      %51 = tpu.matmul %48, %50, %cst_27 {dimension_numbers = #tpu.dot_dimension_numbers<[1], [0], [0], [1], [0, 0, 1, 1], [], []>} : vector<8x8xf32>, vector<8x16xf32>, vector<8x16xf32> -> vector<8x16xf32>
      %c0_28 = arith.constant 0 : index
      %c2 = arith.constant 2 : index
      %c0_29 = arith.constant 0 : index
      %c0_30 = arith.constant 0 : index
      %52 = vector.load %arg10[%c0_28, %c2, %c0_29, %c0_30] : memref<1x4x8x16xf32, #tpu.memory_space<vmem>>, vector<1x1x8x16xf32>
      %53 = vector.shape_cast %52 : vector<1x1x8x16xf32> to vector<8x16xf32>
      %54 = vector.shape_cast %51 : vector<8x16xf32> to vector<1x1x8x16xf32>
      tpu.vector_store %arg10[%c0_28, %c2, %c0_29, %c0_30], %54 {strides = array<i32>} : memref<1x4x8x16xf32, #tpu.memory_space<vmem>>, vector<1x1x8x16xf32>,
      %c0_31 = arith.constant 0 : index
      %c0_32 = arith.constant 0 : index
      %55 = vector.load %arg6[%c0_31, %c0_32] : memref<8x8xf32, #tpu.memory_space<vmem>>, vector<8x8xf32>
      %56 = vector.extract_strided_slice %33 {offsets = [3, 0, 0], sizes = [1, 8, 16], strides = [1, 1, 1]} : vector<4x8x16xf32> to vector<1x8x16xf32>
      %57 = vector.shape_cast %56 : vector<1x8x16xf32> to vector<8x16xf32>
      %cst_33 = arith.constant dense<0.000000e+00> : vector<8x16xf32>
      %58 = tpu.matmul %55, %57, %cst_33 {dimension_numbers = #tpu.dot_dimension_numbers<[1], [0], [0], [1], [0, 0, 1, 1], [], []>} : vector<8x8xf32>, vector<8x16xf32>, vector<8x16xf32> -> vector<8x16xf32>
      %c0_34 = arith.constant 0 : index
      %c3 = arith.constant 3 : index
      %c0_35 = arith.constant 0 : index
      %c0_36 = arith.constant 0 : index
      %59 = vector.load %arg10[%c0_34, %c3, %c0_35, %c0_36] : memref<1x4x8x16xf32, #tpu.memory_space<vmem>>, vector<1x1x8x16xf32>
      %60 = vector.shape_cast %59 : vector<1x1x8x16xf32> to vector<8x16xf32>
      %61 = vector.shape_cast %58 : vector<8x16xf32> to vector<1x1x8x16xf32>
      tpu.vector_store %arg10[%c0_34, %c3, %c0_35, %c0_36], %61 {strides = array<i32>} : memref<1x4x8x16xf32, #tpu.memory_space<vmem>>, vector<1x1x8x16xf32>,
    } else {
    }
    %29 = arith.andi %2, %5 : i1
    %30 = arith.extui %29 : i1 to i32
    %c0_i32_9 = arith.constant 0 : i32
    %31 = arith.cmpi ne, %30, %c0_i32_9 : i32
    scf.if %31 {
      %c0 = arith.constant 0 : index
      %c0_10 = arith.constant 0 : index
      %c0_11 = arith.constant 0 : index
      %c0_12 = arith.constant 0 : index
      %32 = vector.load %arg8[%c0, %c0_10, %c0_11, %c0_12] : memref<1x4x8x16xf32, #tpu.memory_space<vmem>>, vector<1x4x8x16xf32>
      %33 = vector.shape_cast %32 : vector<1x4x8x16xf32> to vector<4x8x16xf32>
      %c0_13 = arith.constant 0 : index
      %c0_14 = arith.constant 0 : index
      %34 = vector.load %arg5[%c0_13, %c0_14] : memref<16x16xf32, #tpu.memory_space<vmem>>, vector<16x16xf32>
      %c0_15 = arith.constant 0 : index
      %c0_16 = arith.constant 0 : index
      %35 = vector.load %arg6[%c0_15, %c0_16] : memref<8x8xf32, #tpu.memory_space<vmem>>, vector<8x8xf32>
      %36 = vector.extract_strided_slice %33 {offsets = [0, 0, 0], sizes = [1, 8, 16], strides = [1, 1, 1]} : vector<4x8x16xf32> to vector<1x8x16xf32>
      %37 = vector.shape_cast %36 : vector<1x8x16xf32> to vector<8x16xf32>
      %cst = arith.constant dense<0.000000e+00> : vector<8x16xf32>
      %38 = tpu.matmul %35, %37, %cst {dimension_numbers = #tpu.dot_dimension_numbers<[1], [0], [0], [1], [0, 0, 1, 1], [], []>} : vector<8x8xf32>, vector<8x16xf32>, vector<8x16xf32> -> vector<8x16xf32>
      %cst_17 = arith.constant dense<0.000000e+00> : vector<8x16xf32>
      %39 = tpu.matmul %38, %34, %cst_17 {dimension_numbers = #tpu.dot_dimension_numbers<[1], [0], [0], [1], [0, 0, 1, 1], [], []>} : vector<8x16xf32>, vector<16x16xf32>, vector<8x16xf32> -> vector<8x16xf32>
      %c0_18 = arith.constant 0 : index
      %c0_19 = arith.constant 0 : index
      %c0_20 = arith.constant 0 : index
      %c0_21 = arith.constant 0 : index
      %40 = vector.load %arg10[%c0_18, %c0_19, %c0_20, %c0_21] : memref<1x4x8x16xf32, #tpu.memory_space<vmem>>, vector<1x1x8x16xf32>
      %41 = vector.shape_cast %40 : vector<1x1x8x16xf32> to vector<8x16xf32>
      %42 = vector.shape_cast %39 : vector<8x16xf32> to vector<1x1x8x16xf32>
      tpu.vector_store %arg10[%c0_18, %c0_19, %c0_20, %c0_21], %42 {strides = array<i32>} : memref<1x4x8x16xf32, #tpu.memory_space<vmem>>, vector<1x1x8x16xf32>,
      %c0_22 = arith.constant 0 : index
      %c0_23 = arith.constant 0 : index
      %43 = vector.load %arg6[%c0_22, %c0_23] : memref<8x8xf32, #tpu.memory_space<vmem>>, vector<8x8xf32>
      %44 = vector.extract_strided_slice %33 {offsets = [1, 0, 0], sizes = [1, 8, 16], strides = [1, 1, 1]} : vector<4x8x16xf32> to vector<1x8x16xf32>
      %45 = vector.shape_cast %44 : vector<1x8x16xf32> to vector<8x16xf32>
      %cst_24 = arith.constant dense<0.000000e+00> : vector<8x16xf32>
      %46 = tpu.matmul %43, %45, %cst_24 {dimension_numbers = #tpu.dot_dimension_numbers<[1], [0], [0], [1], [0, 0, 1, 1], [], []>} : vector<8x8xf32>, vector<8x16xf32>, vector<8x16xf32> -> vector<8x16xf32>
      %cst_25 = arith.constant dense<0.000000e+00> : vector<8x16xf32>
      %47 = tpu.matmul %46, %34, %cst_25 {dimension_numbers = #tpu.dot_dimension_numbers<[1], [0], [0], [1], [0, 0, 1, 1], [], []>} : vector<8x16xf32>, vector<16x16xf32>, vector<8x16xf32> -> vector<8x16xf32>
      %c0_26 = arith.constant 0 : index
      %c1 = arith.constant 1 : index
      %c0_27 = arith.constant 0 : index
      %c0_28 = arith.constant 0 : index
      %48 = vector.load %arg10[%c0_26, %c1, %c0_27, %c0_28] : memref<1x4x8x16xf32, #tpu.memory_space<vmem>>, vector<1x1x8x16xf32>
      %49 = vector.shape_cast %48 : vector<1x1x8x16xf32> to vector<8x16xf32>
      %50 = vector.shape_cast %47 : vector<8x16xf32> to vector<1x1x8x16xf32>
      tpu.vector_store %arg10[%c0_26, %c1, %c0_27, %c0_28], %50 {strides = array<i32>} : memref<1x4x8x16xf32, #tpu.memory_space<vmem>>, vector<1x1x8x16xf32>,
      %c0_29 = arith.constant 0 : index
      %c0_30 = arith.constant 0 : index
      %51 = vector.load %arg6[%c0_29, %c0_30] : memref<8x8xf32, #tpu.memory_space<vmem>>, vector<8x8xf32>
      %52 = vector.extract_strided_slice %33 {offsets = [2, 0, 0], sizes = [1, 8, 16], strides = [1, 1, 1]} : vector<4x8x16xf32> to vector<1x8x16xf32>
      %53 = vector.shape_cast %52 : vector<1x8x16xf32> to vector<8x16xf32>
      %cst_31 = arith.constant dense<0.000000e+00> : vector<8x16xf32>
      %54 = tpu.matmul %51, %53, %cst_31 {dimension_numbers = #tpu.dot_dimension_numbers<[1], [0], [0], [1], [0, 0, 1, 1], [], []>} : vector<8x8xf32>, vector<8x16xf32>, vector<8x16xf32> -> vector<8x16xf32>
      %cst_32 = arith.constant dense<0.000000e+00> : vector<8x16xf32>
      %55 = tpu.matmul %54, %34, %cst_32 {dimension_numbers = #tpu.dot_dimension_numbers<[1], [0], [0], [1], [0, 0, 1, 1], [], []>} : vector<8x16xf32>, vector<16x16xf32>, vector<8x16xf32> -> vector<8x16xf32>
      %c0_33 = arith.constant 0 : index
      %c2 = arith.constant 2 : index
      %c0_34 = arith.constant 0 : index
      %c0_35 = arith.constant 0 : index
      %56 = vector.load %arg10[%c0_33, %c2, %c0_34, %c0_35] : memref<1x4x8x16xf32, #tpu.memory_space<vmem>>, vector<1x1x8x16xf32>
      %57 = vector.shape_cast %56 : vector<1x1x8x16xf32> to vector<8x16xf32>
      %58 = vector.shape_cast %55 : vector<8x16xf32> to vector<1x1x8x16xf32>
      tpu.vector_store %arg10[%c0_33, %c2, %c0_34, %c0_35], %58 {strides = array<i32>} : memref<1x4x8x16xf32, #tpu.memory_space<vmem>>, vector<1x1x8x16xf32>,
      %c0_36 = arith.constant 0 : index
      %c0_37 = arith.constant 0 : index
      %59 = vector.load %arg6[%c0_36, %c0_37] : memref<8x8xf32, #tpu.memory_space<vmem>>, vector<8x8xf32>
      %60 = vector.extract_strided_slice %33 {offsets = [3, 0, 0], sizes = [1, 8, 16], strides = [1, 1, 1]} : vector<4x8x16xf32> to vector<1x8x16xf32>
      %61 = vector.shape_cast %60 : vector<1x8x16xf32> to vector<8x16xf32>
      %cst_38 = arith.constant dense<0.000000e+00> : vector<8x16xf32>
      %62 = tpu.matmul %59, %61, %cst_38 {dimension_numbers = #tpu.dot_dimension_numbers<[1], [0], [0], [1], [0, 0, 1, 1], [], []>} : vector<8x8xf32>, vector<8x16xf32>, vector<8x16xf32> -> vector<8x16xf32>
      %cst_39 = arith.constant dense<0.000000e+00> : vector<8x16xf32>
      %63 = tpu.matmul %62, %34, %cst_39 {dimension_numbers = #tpu.dot_dimension_numbers<[1], [0], [0], [1], [0, 0, 1, 1], [], []>} : vector<8x16xf32>, vector<16x16xf32>, vector<8x16xf32> -> vector<8x16xf32>
      %c0_40 = arith.constant 0 : index
      %c3 = arith.constant 3 : index
      %c0_41 = arith.constant 0 : index
      %c0_42 = arith.constant 0 : index
      %64 = vector.load %arg10[%c0_40, %c3, %c0_41, %c0_42] : memref<1x4x8x16xf32, #tpu.memory_space<vmem>>, vector<1x1x8x16xf32>
      %65 = vector.shape_cast %64 : vector<1x1x8x16xf32> to vector<8x16xf32>
      %66 = vector.shape_cast %63 : vector<8x16xf32> to vector<1x1x8x16xf32>
      tpu.vector_store %arg10[%c0_40, %c3, %c0_41, %c0_42], %66 {strides = array<i32>} : memref<1x4x8x16xf32, #tpu.memory_space<vmem>>, vector<1x1x8x16xf32>,
    } else {
    }
    return
  }
  func.func @transform_0(%arg0: i32, %arg1: i32, %arg2: i32, %arg3: memref<4xi32, #tpu.memory_space<smem>>, %arg4: memref<4xi32, #tpu.memory_space<smem>>) -> (i32, i32) {
    %c0_i32 = arith.constant 0 : i32
    %c0_i32_0 = arith.constant 0 : i32
    %c0_i32_1 = arith.constant 0 : i32
    return %c0_i32, %c0_i32_0 : i32, i32
  }
  func.func @transform_1(%arg0: i32, %arg1: i32, %arg2: i32, %arg3: memref<4xi32, #tpu.memory_space<smem>>, %arg4: memref<4xi32, #tpu.memory_space<smem>>) -> (i32, i32) {
    %c0_i32 = arith.constant 0 : i32
    %c0_i32_0 = arith.constant 0 : i32
    %c0_i32_1 = arith.constant 0 : i32
    return %c0_i32, %c0_i32_0 : i32, i32
  }
  func.func @transform_2(%arg0: i32, %arg1: i32, %arg2: i32, %arg3: memref<4xi32, #tpu.memory_space<smem>>, %arg4: memref<4xi32, #tpu.memory_space<smem>>) -> (i32, i32, i32, i32) {
    %c0_i32 = arith.constant 0 : i32
    %c0_i32_0 = arith.constant 0 : i32
    return %arg0, %c0_i32, %arg1, %arg2 : i32, i32, i32, i32
  }
  func.func @transform_3(%arg0: i32, %arg1: i32, %arg2: i32, %arg3: memref<4xi32, #tpu.memory_space<smem>>, %arg4: memref<4xi32, #tpu.memory_space<smem>>) -> (i32, i32, i32, i32) {
    %c0_i32 = arith.constant 0 : i32
    %c0_i32_0 = arith.constant 0 : i32
    return %arg0, %c0_i32, %arg1, %arg2 : i32, i32, i32, i32
  }
  func.func @transform_4(%arg0: i32, %arg1: i32, %arg2: i32, %arg3: memref<4xi32, #tpu.memory_space<smem>>, %arg4: memref<4xi32, #tpu.memory_space<smem>>) -> (i32, i32, i32, i32) {
    %0 = arith.index_cast %arg0 : i32 to index
    %1 = memref.load %arg4[%0] : memref<4xi32, #tpu.memory_space<smem>>
    %c0_i32 = arith.constant 0 : i32
    %2 = arith.cmpi ne, %1, %c0_i32 : i32
    %c1_i32 = arith.constant 1 : i32
    %3 = arith.subi %c1_i32, %arg1 : i32
    %4 = arith.select %2, %3, %arg1 : i32
    %5 = arith.index_cast %arg0 : i32 to index
    %6 = memref.load %arg3[%5] : memref<4xi32, #tpu.memory_space<smem>>
    %c0_i32_0 = arith.constant 0 : i32
    %7 = arith.cmpi ne, %6, %c0_i32_0 : i32
    %c0_i32_1 = arith.constant 0 : i32
    %8 = arith.subi %c0_i32_1, %arg2 : i32
    %9 = arith.select %7, %8, %arg2 : i32
    %c0_i32_2 = arith.constant 0 : i32
    %c0_i32_3 = arith.constant 0 : i32
    return %arg0, %c0_i32_2, %4, %9 : i32, i32, i32, i32
  }
  func.func @transform_5(%arg0: i32, %arg1: i32, %arg2: i32, %arg3: memref<4xi32, #tpu.memory_space<smem>>, %arg4: memref<4xi32, #tpu.memory_space<smem>>) -> (i32, i32, i32, i32) {
    %0 = arith.index_cast %arg0 : i32 to index
    %1 = memref.load %arg4[%0] : memref<4xi32, #tpu.memory_space<smem>>
    %c0_i32 = arith.constant 0 : i32
    %2 = arith.cmpi ne, %1, %c0_i32 : i32
    %c1_i32 = arith.constant 1 : i32
    %3 = arith.subi %c1_i32, %arg1 : i32
    %4 = arith.select %2, %3, %arg1 : i32
    %5 = arith.index_cast %arg0 : i32 to index
    %6 = memref.load %arg3[%5] : memref<4xi32, #tpu.memory_space<smem>>
    %c0_i32_0 = arith.constant 0 : i32
    %7 = arith.cmpi ne, %6, %c0_i32_0 : i32
    %c0_i32_1 = arith.constant 0 : i32
    %8 = arith.subi %c0_i32_1, %arg2 : i32
    %9 = arith.select %7, %8, %arg2 : i32
    %c0_i32_2 = arith.constant 0 : i32
    %c0_i32_3 = arith.constant 0 : i32
    return %arg0, %c0_i32_2, %4, %9 : i32, i32, i32, i32
  }
}

</mosaic_0001>

<llo_original>
// kernel: tpu_custom_call.1
$region0: #{tpu_custom_call.1}
  #allocation0 [shape = 'u32[]', space=smem, size = 0x4, offset = 0x4, fixed_abs, tag = 'smem constant byte address 0x4 - core index']
  #allocation1 [shape = 'u32[72,128]{1,0:T(1,128)}', space=vmem, size = 0x9000, scoped, tag = 'internal scratch']
  #allocation2 [shape = 's32[1]{0}', space=sflag, size = 0x4, scoped, tag = 'scoped memory for tpu_custom_call.1']
  #allocation3 [shape = 'u8[512]{0}', space=smem, size = 0x200, scoped, tag = 'prefetched SMEM operand 0']
  #allocation4 [shape = 'u8[512]{0}', space=smem, size = 0x200, scoped, tag = 'prefetched SMEM operand 1']
  %s0 = inlined_call_operand.hbm [shape: s32[4], index: 0, kind: input, shape index: {}]
  %s1 = inlined_call_operand.hbm [shape: s32[4], index: 1, kind: input, shape index: {}]
  %s2 = inlined_call_operand.hbm [shape: f32[16,16], index: 2, kind: input, shape index: {}]
  %s3 = inlined_call_operand.hbm [shape: f32[8,8], index: 3, kind: input, shape index: {}]
  %s4 = inlined_call_operand.hbm [shape: f32[4,4,16,16], index: 4, kind: input, shape index: {}]
  %s5 = inlined_call_operand.hbm [shape: f32[4,4,16,16], index: 5, kind: input, shape index: {}]
  %s6 = inlined_call_operand.hbm [shape: f32[4,4,16,16], index: 6, kind: output, shape index: {0}]
  %s7 = inlined_call_operand.hbm [shape: f32[4,4,16,16], index: 7, kind: output, shape index: {1}]
  %8 = xla_tuple %s6, %s7
  %s9 = sld [smem:[#allocation0]]
  $region105: #{tpu_custom_call.1} parent=0
    _
  %s11 = ssub.s32 1, %s9
  %s12 = scalar_select 0, %s11, %s9
  %s14 = sshll.u32 %s0, 4
  %s15 = int_to_ptr.hbm [resolvable:$true] %s14
  %17 = dma.hbm_to_smem %s15, 16, [#allocation3], [#allocation2]
  %s19 = sshll.u32 %s1, 4
  %s20 = int_to_ptr.hbm [resolvable:$true] %s19
  %22 = dma.hbm_to_smem %s20, 16, [#allocation4], [#allocation2]
  %24 = dma.done [#allocation2], 32
  %25 = sfence
  $region1: #{tpu_custom_call.1} parent=0
    #allocation5 [shape = 'u8[8192]{0}', space=vmem, size = 0x2000, scoped, tag = 'input window, operand 2, single buffered']
    #allocation6 [shape = 's32[2]{0}', space=sflag, size = 0x8, scoped, tag = 'scoped memory for tpu_custom_call.1']
    #allocation7 [shape = 's32[2]{0}', space=sflag, size = 0x8, scoped, tag = 'scoped memory for tpu_custom_call.1']
    #allocation8 [shape = 'u8[4096]{0}', space=vmem, size = 0x1000, scoped, tag = 'input window, operand 3, single buffered']
    #allocation9 [shape = 's32[1]{0}', space=sflag, size = 0x4, scoped, tag = 'scoped memory for tpu_custom_call.1']
    #allocation10 [shape = 'u8[32768]{0}', space=vmem, size = 0x8000, scoped, tag = 'input window, operand 4']
    #allocation11 [shape = 'u8[32768]{0}', space=vmem, size = 0x8000, scoped, tag = 'input window, operand 5']
    #allocation12 [shape = 'u8[32768]{0}', space=vmem, size = 0x8000, scoped, tag = 'output window, operand 0']
    #allocation13 [shape = 'u8[32768]{0}', space=vmem, size = 0x8000, scoped, tag = 'output window, operand 1']
    #allocation14 [shape = 's32[2]{0}', space=sflag, size = 0x8, scoped, tag = 'scoped memory for tpu_custom_call.1']
    %26 = vsyncpa [#allocation6], 0
    %27 = vsyncpa [#allocation9], 0
    %28 = vsyncpa [#allocation7], 0
    %s29 = scalar_lea.sflag [#allocation7], 1
    %30 = vsyncpa %s29, 0
    %31 = vsyncpa [#allocation14], 0
    %s32 = scalar_lea.sflag [#allocation14], 1
    %33 = vsyncpa %s32, 0
    loop: start=0, step=1, limit=10
    $region2: #{tpu_custom_call.1} parent=1 // loop_pre_header
      _
    $region3: #{tpu_custom_call.1} parent=1 // loop_header
      %s35 = sphi 0, %s39
      %p36 = scmp.ge.s32.totalorder %s35, 10
      %s42 = sphi 0, %s61
      %s43 = sphi 0, %s57
      %s44 = sphi 0, %s53
      %s45 = sphi 0, %s42
      %s46 = sphi 0, %s43
      %s47 = sphi 0, %s44
      %s48 = sphi 0, %s45
      %s49 = sphi 0, %s46
      %s50 = sphi 0, %s47
      %s62 = sphi 0, %s62
      %s64 = sphi 0, %s62
      %s65 = sphi 0, %s64
      %s79 = sphi 0, %s65
      %s83 = sphi 0, %s83
      %s85 = sphi 0, %s83
      %s86 = sphi 0, %s85
      %s100 = sphi 0, %s86
      %s110 = sphi 0, %s112
      %s113 = sphi 0, %s110
      %s114 = sphi 0, %s113
      %s130 = sphi 0, %s114
      %s140 = sphi 0, %s142
      %s143 = sphi 0, %s140
      %s144 = sphi 0, %s143
      %s160 = sphi 0, %s144
      %s186 = sphi 0, %s188
      %s189 = sphi 0, %s186
      %s190 = sphi 0, %s189
      %s206 = sphi 0, %s190
      %s232 = sphi 0, %s234
      %s235 = sphi 0, %s232
      %s236 = sphi 0, %s235
      %s252 = sphi 0, %s236
    $region4: #{tpu_custom_call.1} parent=1 // loop_header_branch
      %38 = sbr.rel (%p36) target = $region8
    $region5: #{tpu_custom_call.1} parent=1 // loop_body
      %s40 = ssub.s32 %s35, 1
      %s41 = ssub.s32 %s35, 2
      %s51 = sadd.s32 1, %s44
      %p52 = scmp.ge.s32.totalorder %s51, 1
      %s53 = scalar_select %p52, 0, %s51
      %s54 = sadd.s32 1, %s43
      %s55 = scalar_select %p52, %s54, %s43
      %p56 = scmp.ge.s32.totalorder %s55, 2
      %s57 = scalar_select %p56, 0, %s55
      %s58 = sadd.s32 1, %s42
      %s59 = scalar_select %p56, %s58, %s42
      %p60 = scmp.ge.s32.totalorder %s59, 4
      %s61 = scalar_select %p60, 0, %s59
      %s63 = sadd.s32 %s62, 1
      %p66 = scmp.eq.s32.totalorder %s35, 7
      %p67 = scmp.ne.s32.totalorder %s62, %s64
      %p68 = scmp.eq.s32.totalorder %s35, 0
      %p69 = por %p67, %p68
      %p70 = scmp.ne.s32.totalorder %s62, %s64
      %p71 = scmp.eq.s32.totalorder %s40, 7
      %p72 = por %p70, %p71
      %p73 = scmp.ne.s32.totalorder %s64, %s65
      %p74 = scmp.eq.s32.totalorder %s40, 0
      %p75 = por %p73, %p74
      %p76 = scmp.ne.s32.totalorder %s64, %s65
      %p77 = scmp.eq.s32.totalorder %s41, 7
      %p78 = por %p76, %p77
      %p80 = scmp.ne.s32.totalorder %s65, %s79
      %p81 = scmp.eq.s32.totalorder %s41, 0
      %p82 = por %p80, %p81
      %s84 = sadd.s32 %s83, 1
      %p87 = scmp.eq.s32.totalorder %s35, 7
      %p88 = scmp.ne.s32.totalorder %s83, %s85
      %p89 = scmp.eq.s32.totalorder %s35, 0
      %p90 = por %p88, %p89
      %p91 = scmp.ne.s32.totalorder %s83, %s85
      %p92 = scmp.eq.s32.totalorder %s40, 7
      %p93 = por %p91, %p92
      %p94 = scmp.ne.s32.totalorder %s85, %s86
      %p95 = scmp.eq.s32.totalorder %s40, 0
      %p96 = por %p94, %p95
      %p97 = scmp.ne.s32.totalorder %s85, %s86
      %p98 = scmp.eq.s32.totalorder %s41, 7
      %p99 = por %p97, %p98
      %p101 = scmp.ne.s32.totalorder %s86, %s100
      %p102 = scmp.eq.s32.totalorder %s41, 0
      %p103 = por %p101, %p102
      %s104 = ssub.s32 %s42, %s61
      %s105 = ssub.s32 %s43, %s57
      %s106 = sor.u32 %s104, %s105
      %s107 = ssub.s32 %s44, %s53
      %s108 = sor.u32 %s106, %s107
      %p109 = scmp.eq.s32.totalorder %s108, 0
      %s111 = sadd.s32 %s110, 1
      %s112 = scalar_select %p109, %s110, %s111
      %p115 = pneg %p109
      %p116 = scmp.eq.s32.totalorder %s35, 7
      %p117 = por %p115, %p116
      %p118 = scmp.ne.s32.totalorder %s110, %s113
      %p119 = scmp.eq.s32.totalorder %s35, 0
      %p120 = por %p118, %p119
      %p121 = scmp.ne.s32.totalorder %s110, %s113
      %p122 = scmp.eq.s32.totalorder %s40, 7
      %p123 = por %p121, %p122
      %p124 = scmp.ne.s32.totalorder %s113, %s114
      %p125 = scmp.eq.s32.totalorder %s40, 0
      %p126 = por %p124, %p125
      %p127 = scmp.ne.s32.totalorder %s113, %s114
      %p128 = scmp.eq.s32.totalorder %s41, 7
      %p129 = por %p127, %p128
      %p131 = scmp.ne.s32.totalorder %s114, %s130
      %p132 = scmp.eq.s32.totalorder %s41, 0
      %p133 = por %p131, %p132
      %s134 = ssub.s32 %s42, %s61
      %s135 = ssub.s32 %s43, %s57
      %s136 = sor.u32 %s134, %s135
      %s137 = ssub.s32 %s44, %s53
      %s138 = sor.u32 %s136, %s137
      %p139 = scmp.eq.s32.totalorder %s138, 0
      %s141 = sadd.s32 %s140, 1
      %s142 = scalar_select %p139, %s140, %s141
      %p145 = pneg %p139
      %p146 = scmp.eq.s32.totalorder %s35, 7
      %p147 = por %p145, %p146
      %p148 = scmp.ne.s32.totalorder %s140, %s143
      %p149 = scmp.eq.s32.totalorder %s35, 0
      %p150 = por %p148, %p149
      %p151 = scmp.ne.s32.totalorder %s140, %s143
      %p152 = scmp.eq.s32.totalorder %s40, 7
      %p153 = por %p151, %p152
      %p154 = scmp.ne.s32.totalorder %s143, %s144
      %p155 = scmp.eq.s32.totalorder %s40, 0
      %p156 = por %p154, %p155
      %p157 = scmp.ne.s32.totalorder %s143, %s144
      %p158 = scmp.eq.s32.totalorder %s41, 7
      %p159 = por %p157, %p158
      %p161 = scmp.ne.s32.totalorder %s144, %s160
      %p162 = scmp.eq.s32.totalorder %s41, 0
      %p163 = por %p161, %p162
      %s164 = sld [smem:[#allocation4 + %s42]]
      %p165 = scmp.ne.s32.totalorder %s164, 0
      %s166 = ssub.s32 1, %s43
      %s167 = scalar_select %p165, %s166, %s43
      %s168 = sld [smem:[#allocation3 + %s42]]
      %p169 = scmp.ne.s32.totalorder %s168, 0
      %s170 = ssub.s32 0, %s44
      %s171 = scalar_select %p169, %s170, %s44
      %s172 = sld [smem:[#allocation4 + %s61]]
      %p173 = scmp.ne.s32.totalorder %s172, 0
      %s174 = ssub.s32 1, %s57
      %s175 = scalar_select %p173, %s174, %s57
      %s176 = sld [smem:[#allocation3 + %s61]]
      %p177 = scmp.ne.s32.totalorder %s176, 0
      %s178 = ssub.s32 0, %s53
      %s179 = scalar_select %p177, %s178, %s53
      %s180 = ssub.s32 %s42, %s61
      %s181 = ssub.s32 %s167, %s175
      %s182 = sor.u32 %s180, %s181
      %s183 = ssub.s32 %s171, %s179
      %s184 = sor.u32 %s182, %s183
      %p185 = scmp.eq.s32.totalorder %s184, 0
      %s187 = sadd.s32 %s186, 1
      %s188 = scalar_select %p185, %s186, %s187
      %p191 = pneg %p185
      %p192 = scmp.eq.s32.totalorder %s35, 7
      %p193 = por %p191, %p192
      %p194 = scmp.ne.s32.totalorder %s186, %s189
      %p195 = scmp.eq.s32.totalorder %s35, 0
      %p196 = por %p194, %p195
      %p197 = scmp.ne.s32.totalorder %s186, %s189
      %p198 = scmp.eq.s32.totalorder %s40, 7
      %p199 = por %p197, %p198
      %p200 = scmp.ne.s32.totalorder %s189, %s190
      %p201 = scmp.eq.s32.totalorder %s40, 0
      %p202 = por %p200, %p201
      %p203 = scmp.ne.s32.totalorder %s189, %s190
      %p204 = scmp.eq.s32.totalorder %s41, 7
      %p205 = por %p203, %p204
      %p207 = scmp.ne.s32.totalorder %s190, %s206
      %p208 = scmp.eq.s32.totalorder %s41, 0
      %p209 = por %p207, %p208
      %s210 = sld [smem:[#allocation4 + %s42]]
      %p211 = scmp.ne.s32.totalorder %s210, 0
      %s212 = ssub.s32 1, %s43
      %s213 = scalar_select %p211, %s212, %s43
      %s214 = sld [smem:[#allocation3 + %s42]]
      %p215 = scmp.ne.s32.totalorder %s214, 0
      %s216 = ssub.s32 0, %s44
      %s217 = scalar_select %p215, %s216, %s44
      %s218 = sld [smem:[#allocation4 + %s61]]
      %p219 = scmp.ne.s32.totalorder %s218, 0
      %s220 = ssub.s32 1, %s57
      %s221 = scalar_select %p219, %s220, %s57
      %s222 = sld [smem:[#allocation3 + %s61]]
      %p223 = scmp.ne.s32.totalorder %s222, 0
      %s224 = ssub.s32 0, %s53
      %s225 = scalar_select %p223, %s224, %s53
      %s226 = ssub.s32 %s42, %s61
      %s227 = ssub.s32 %s213, %s221
      %s228 = sor.u32 %s226, %s227
      %s229 = ssub.s32 %s217, %s225
      %s230 = sor.u32 %s228, %s229
      %p231 = scmp.eq.s32.totalorder %s230, 0
      %s233 = sadd.s32 %s232, 1
      %s234 = scalar_select %p231, %s232, %s233
      %p237 = pneg %p231
      %p238 = scmp.eq.s32.totalorder %s35, 7
      %p239 = por %p237, %p238
      %p240 = scmp.ne.s32.totalorder %s232, %s235
      %p241 = scmp.eq.s32.totalorder %s35, 0
      %p242 = por %p240, %p241
      %p243 = scmp.ne.s32.totalorder %s232, %s235
      %p244 = scmp.eq.s32.totalorder %s40, 7
      %p245 = por %p243, %p244
      %p246 = scmp.ne.s32.totalorder %s235, %s236
      %p247 = scmp.eq.s32.totalorder %s40, 0
      %p248 = por %p246, %p247
      %p249 = scmp.ne.s32.totalorder %s235, %s236
      %p250 = scmp.eq.s32.totalorder %s41, 7
      %p251 = por %p249, %p250
      %p253 = scmp.ne.s32.totalorder %s236, %s252
      %p254 = scmp.eq.s32.totalorder %s41, 0
      %p255 = por %p253, %p254
      %p256 = scmp.le.s32.totalorder 1, %s35
      %p257 = scmp.lt.s32.totalorder %s35, 9
      %p258 = pnand %p256, %p257
      %p259 = pneg %p258
      // Predicated region
      $region9: #{tpu_custom_call.1} parent=5 // pred_check
        _
      $region10: #{tpu_custom_call.1} parent=5 // pred_check_branch
        %261 = sbr.rel (%p258) target = $region12
      $region11: #{tpu_custom_call.1} parent=5 // pred_region
        %s262 = ssub.s32 %s35, 1
        // Predicated region
        $region13: #{tpu_custom_call.1} parent=11 // pred_check
          %p263 = pneg %p75
        $region14: #{tpu_custom_call.1} parent=11 // pred_check_branch
          %265 = sbr.rel (%p263) target = $region16
        $region15: #{tpu_custom_call.1} parent=11 // pred_region
          %267 = vsyncadd [#allocation6], 0
          %s268 = sshll.u32 %s2, 4
          %s269 = int_to_ptr.hbm [resolvable:$true] %s268
          %s270 = sshll.u32 [#allocation5], 4
          %s271 = int_to_ptr.vmem [resolvable:$true] %s270
          %276 = dma.hbm_to_vmem [thread:$0]  %s269, 256, %s271, [#allocation6], 128, 128, 8
        $region16: #{tpu_custom_call.1} parent=11 // pred_fallthru
          _
        // Predicated region
        $region17: #{tpu_custom_call.1} parent=11 // pred_check
          %p277 = pneg %p96
        $region18: #{tpu_custom_call.1} parent=11 // pred_check_branch
          %279 = sbr.rel (%p277) target = $region20
        $region19: #{tpu_custom_call.1} parent=11 // pred_region
          %281 = vsyncadd [#allocation9], 0
          %s283 = sshll.u32 %s3, 4
          %s284 = int_to_ptr.hbm [resolvable:$true] %s283
          %s285 = sshll.u32 [#allocation8], 4
          %s286 = int_to_ptr.vmem [resolvable:$true] %s285
          %288 = dma.hbm_to_vmem [thread:$0]  %s284, 128, %s286, [#allocation9]
        $region20: #{tpu_custom_call.1} parent=11 // pred_fallthru
          _
      $region12: #{tpu_custom_call.1} parent=5 // pred_fallthru
        _
      %p289 = scmp.lt.s32.totalorder %s35, 8
      // Predicated region
      $region21: #{tpu_custom_call.1} parent=5 // pred_check
        %p290 = pneg %p289
      $region22: #{tpu_custom_call.1} parent=5 // pred_check_branch
        %292 = sbr.rel (%p290) target = $region24
      $region23: #{tpu_custom_call.1} parent=5 // pred_region
        // Predicated region
        $region25: #{tpu_custom_call.1} parent=23 // pred_check
          %p293 = pneg %p120
        $region26: #{tpu_custom_call.1} parent=23 // pred_check_branch
          %295 = sbr.rel (%p293) target = $region28
        $region27: #{tpu_custom_call.1} parent=23 // pred_region
          %s296 = sand.u32 %s35, 1
          %s297 = scalar_lea.sflag [#allocation6], %s296
          %s298 = sand.u32 %s110, 1
          %s299 = smul.addr %s298, 32
          %s300 = scalar_lea.vmem [#allocation10], %s299
          %302 = vsyncadd %s297, 0
          %s303 = sadd.s32 %s44, %s43
          %s304 = smul.addr %s42, 8
          %s305 = sadd.s32 %s303, %s304
          %s306 = smul.addr %s305, 8
          %s307 = scalar_lea.hbm %s4, %s306
          %s308 = sshll.u32 %s307, 4
          %s309 = int_to_ptr.hbm [resolvable:$true] %s308
          %s310 = sshll.u32 %s300, 4
          %s311 = int_to_ptr.vmem [resolvable:$true] %s310
          %316 = dma.hbm_to_vmem [thread:$0]  %s309, 512, %s311, %s297, 256, 128, 8
        $region28: #{tpu_custom_call.1} parent=23 // pred_fallthru
          _
        // Predicated region
        $region29: #{tpu_custom_call.1} parent=23 // pred_check
          %p317 = pneg %p150
        $region30: #{tpu_custom_call.1} parent=23 // pred_check_branch
          %319 = sbr.rel (%p317) target = $region32
        $region31: #{tpu_custom_call.1} parent=23 // pred_region
          %s320 = sand.u32 %s35, 1
          %s321 = scalar_lea.sflag [#allocation6], %s320
          %s322 = sand.u32 %s140, 1
          %s323 = smul.addr %s322, 32
          %s324 = scalar_lea.vmem [#allocation11], %s323
          %326 = vsyncadd %s321, 0
          %s327 = sadd.s32 %s44, %s43
          %s328 = smul.addr %s42, 8
          %s329 = sadd.s32 %s327, %s328
          %s330 = smul.addr %s329, 8
          %s331 = scalar_lea.hbm %s5, %s330
          %s332 = sshll.u32 %s331, 4
          %s333 = int_to_ptr.hbm [resolvable:$true] %s332
          %s334 = sshll.u32 %s324, 4
          %s335 = int_to_ptr.vmem [resolvable:$true] %s334
          %340 = dma.hbm_to_vmem [thread:$0]  %s333, 512, %s335, %s321, 256, 128, 8
        $region32: #{tpu_custom_call.1} parent=23 // pred_fallthru
          _
      $region24: #{tpu_custom_call.1} parent=5 // pred_fallthru
        _
      %p341 = scmp.le.s32.totalorder 1, %s35
      %p342 = scmp.lt.s32.totalorder %s35, 9
      %p343 = pnand %p341, %p342
      %p344 = pneg %p343
      // Predicated region
      $region33: #{tpu_custom_call.1} parent=5 // pred_check
        _
      $region34: #{tpu_custom_call.1} parent=5 // pred_check_branch
        %346 = sbr.rel (%p343) target = $region36
      $region35: #{tpu_custom_call.1} parent=5 // pred_region
        %s347 = ssub.s32 %s35, 1
        // Predicated region
        $region37: #{tpu_custom_call.1} parent=35 // pred_check
          %p348 = pneg %p75
        $region38: #{tpu_custom_call.1} parent=35 // pred_check_branch
          %350 = sbr.rel (%p348) target = $region40
        $region39: #{tpu_custom_call.1} parent=35 // pred_region
          %352 = dma.done [#allocation6], 256
        $region40: #{tpu_custom_call.1} parent=35 // pred_fallthru
          _
        // Predicated region
        $region41: #{tpu_custom_call.1} parent=35 // pred_check
          %p353 = pneg %p96
        $region42: #{tpu_custom_call.1} parent=35 // pred_check_branch
          %355 = sbr.rel (%p353) target = $region44
        $region43: #{tpu_custom_call.1} parent=35 // pred_region
          %357 = dma.done [#allocation9], 128
        $region44: #{tpu_custom_call.1} parent=35 // pred_fallthru
          _
        %s358 = sand.u32 %s40, 1
        %s359 = scalar_lea.sflag [#allocation6], %s358
        %s360 = sand.u32 %s113, 1
        %s361 = smul.addr %s360, 32
        %s362 = scalar_lea.vmem [#allocation10], %s361
        // Predicated region
        $region45: #{tpu_custom_call.1} parent=35 // pred_check
          %p363 = pneg %p126
        $region46: #{tpu_custom_call.1} parent=35 // pred_check_branch
          %365 = sbr.rel (%p363) target = $region48
        $region47: #{tpu_custom_call.1} parent=35 // pred_region
          %367 = dma.done %s359, 512
        $region48: #{tpu_custom_call.1} parent=35 // pred_fallthru
          _
        %s368 = sand.u32 %s40, 1
        %s369 = scalar_lea.sflag [#allocation6], %s368
        %s370 = sand.u32 %s143, 1
        %s371 = smul.addr %s370, 32
        %s372 = scalar_lea.vmem [#allocation11], %s371
        // Predicated region
        $region49: #{tpu_custom_call.1} parent=35 // pred_check
          %p373 = pneg %p156
        $region50: #{tpu_custom_call.1} parent=35 // pred_check_branch
          %375 = sbr.rel (%p373) target = $region52
        $region51: #{tpu_custom_call.1} parent=35 // pred_region
          %377 = dma.done %s369, 512
        $region52: #{tpu_custom_call.1} parent=35 // pred_fallthru
          _
        %p378 = pneg %p75
        %p379 = pneg %p72
        %p380 = pneg %p96
        %p381 = pneg %p93
        %s382 = sand.u32 %s40, 1
        %s383 = scalar_lea.sflag [#allocation6], %s382
        %s384 = sand.u32 %s113, 1
        %s385 = smul.addr %s384, 32
        %s386 = scalar_lea.vmem [#allocation10], %s385
        %p387 = pneg %p126
        %p388 = pneg %p123
        %s389 = sand.u32 %s40, 1
        %s390 = scalar_lea.sflag [#allocation6], %s389
        %s391 = sand.u32 %s143, 1
        %s392 = smul.addr %s391, 32
        %s393 = scalar_lea.vmem [#allocation11], %s392
        %p394 = pneg %p156
        %p395 = pneg %p153
        %p396 = pneg %p202
        %p397 = pneg %p199
        %s398 = sand.u32 %s189, 1
        %s399 = scalar_lea.sflag [#allocation7], %s398
        %s400 = sand.u32 %s189, 1
        %s401 = smul.addr %s400, 32
        %s402 = scalar_lea.vmem [#allocation12], %s401
        %p403 = pneg %p248
        %p404 = pneg %p245
        %s405 = sand.u32 %s235, 1
        %s406 = scalar_lea.sflag [#allocation14], %s405
        %s407 = sand.u32 %s235, 1
        %s408 = smul.addr %s407, 32
        %s409 = scalar_lea.vmem [#allocation13], %s408
        %s410 = sld [smem:[#allocation4 + %s45]]
        %p411 = scmp.ne.s32.totalorder %s410, 0
        %s412 = ssub.s32 1, %s46
        %s413 = scalar_select %p411, %s412, %s46
        %s414 = sld [smem:[#allocation3 + %s45]]
        %p415 = scmp.ne.s32.totalorder %s414, 0
        %s416 = ssub.s32 0, %s47
        %s417 = scalar_select %p415, %s416, %s47
        %s418 = sld [smem:[#allocation4 + %s45]]
        %p419 = scmp.ne.s32.totalorder %s418, 0
        %s420 = ssub.s32 1, %s46
        %s421 = scalar_select %p419, %s420, %s46
        %s422 = sld [smem:[#allocation3 + %s45]]
        %p423 = scmp.ne.s32.totalorder %s422, 0
        %s424 = ssub.s32 0, %s47
        %s425 = scalar_select %p423, %s424, %s47
        %s426 = sld [smem:[#allocation3 + %s45]]
        %p427 = scmp.ne.s32.totalorder %s426, 0
        %s428 = sld [smem:[#allocation4 + %s45]]
        %p429 = scmp.ne.s32.totalorder %s428, 0
        %p430 = scmp.eq.s32.totalorder %s426, 0
        %p431 = scmp.eq.s32.totalorder %s428, 0
        %p432 = pnand %p430, %p431
        %p433 = pneg %p432
        // Predicated region
        $region53: #{tpu_custom_call.1} parent=35 // pred_check
          _
        $region54: #{tpu_custom_call.1} parent=35 // pred_check_branch
          %435 = sbr.rel (%p432) target = $region56
        $region55: #{tpu_custom_call.1} parent=35 // pred_region
          %v436 = vld [vmem:[%s362] sm:$0xff]
          %v437 = vld [vmem:[%s362 + $0x8] sm:$0xff]
          %v438 = vld [vmem:[%s362 + $0x10] sm:$0xff]
          %v439 = vld [vmem:[%s362 + $0x18] sm:$0xff]
          %vm440 = vcmask 130048
          %441 = vst.msk [vmem:[%s402] sm:$0xff] %vm440, %v436
          %442 = vst.msk [vmem:[%s402 + $0x8] sm:$0xff] %vm440, %v437
          %443 = vst.msk [vmem:[%s402 + $0x10] sm:$0xff] %vm440, %v438
          %444 = vst.msk [vmem:[%s402 + $0x18] sm:$0xff] %vm440, %v439
        $region56: #{tpu_custom_call.1} parent=35 // pred_fallthru
          _
        %p445 = pnand %p427, %p431
        %p446 = pneg %p445
        // Predicated region
        $region57: #{tpu_custom_call.1} parent=35 // pred_check
          _
        $region58: #{tpu_custom_call.1} parent=35 // pred_check_branch
          %448 = sbr.rel (%p445) target = $region60
        $region59: #{tpu_custom_call.1} parent=35 // pred_region
          %v449 = vld [vmem:[%s362] sm:$0xff]
          %v450 = vld [vmem:[%s362 + $0x8] sm:$0xff]
          %v451 = vld [vmem:[%s362 + $0x10] sm:$0xff]
          %v452 = vld [vmem:[%s362 + $0x18] sm:$0xff]
          %v453 = vld [vmem:[#allocation5] sm:$0xff]
          %v454 = vld [vmem:[#allocation5 + $0x8] sm:$0xff]
          %vm455 = vcmask 130048
          %v457 = vsel %vm455, %v449, 0
          %v460 = vsel %vm455, %v450, 0
          %v463 = vsel %vm455, %v451, 0
          %v466 = vsel %vm455, %v452, 0
          %468 = vmatpush.msra.mxu0 0.0
          %469 = vmatpush.msra.mxu0 0.0
          %470 = vmatpush.msra.mxu0 0.0
          %471 = vmatpush.msra.mxu0 0.0
          %472 = vmatpush.msra.mxu0 0.0
          %473 = vmatpush.msra.mxu0 0.0
          %474 = vmatpush.msra.mxu0 0.0
          %475 = vmatpush.msra.mxu0 0.0
          %476 = vmatpush.msra.mxu0 0.0
          %477 = vmatpush.msra.mxu0 0.0
          %478 = vmatpush.msra.mxu0 0.0
          %479 = vmatpush.msra.mxu0 0.0
          %480 = vmatpush.msra.mxu0 0.0
          %481 = vmatpush.msra.mxu0 0.0
          %482 = vmatpush.msra.mxu0 %v454
          %483 = vmatpush.msra.mxu0 %v453
          %484 = vmatmul.f32.gmra.mxu0 %v457
          %v485 = vpop.f32.mrf.mxu0
          %v486 = vadd.f32 0.0, %v485
          %487 = vmatmul.f32.gmra.mxu0 %v460
          %v488 = vpop.f32.mrf.mxu0
          %v489 = vadd.f32 0.0, %v488
          %490 = vmatmul.f32.gmra.mxu0 %v463
          %v491 = vpop.f32.mrf.mxu0
          %v492 = vadd.f32 0.0, %v491
          %493 = vmatmul.f32.gmra.mxu0 %v466
          %v494 = vpop.f32.mrf.mxu0
          %v495 = vadd.f32 0.0, %v494
          %496 = vdwg.mxu0
          %497 = vst.msk [vmem:[%s402] sm:$0xff] %vm455, %v486
          %498 = vst.msk [vmem:[%s402 + $0x8] sm:$0xff] %vm455, %v489
          %499 = vst.msk [vmem:[%s402 + $0x10] sm:$0xff] %vm455, %v492
          %500 = vst.msk [vmem:[%s402 + $0x18] sm:$0xff] %vm455, %v495
        $region60: #{tpu_custom_call.1} parent=35 // pred_fallthru
          _
        %p501 = pnand %p430, %p429
        %p502 = pneg %p501
        // Predicated region
        $region61: #{tpu_custom_call.1} parent=35 // pred_check
          _
        $region62: #{tpu_custom_call.1} parent=35 // pred_check_branch
          %504 = sbr.rel (%p501) target = $region64
        $region63: #{tpu_custom_call.1} parent=35 // pred_region
          %v505 = vld [vmem:[%s362] sm:$0xff]
          %v506 = vld [vmem:[%s362 + $0x8] sm:$0xff]
          %v507 = vld [vmem:[%s362 + $0x10] sm:$0xff]
          %v508 = vld [vmem:[%s362 + $0x18] sm:$0xff]
          %v509 = vld [vmem:[#allocation8] sm:$0xff]
          %vm510 = vcmask 64512
          %v512 = vsel %vm510, %v509, 0
          %514 = vmatpush.msra.mxu0 0.0
          %515 = vmatpush.msra.mxu0 0.0
          %516 = vmatpush.msra.mxu0 0.0
          %517 = vmatpush.msra.mxu0 0.0
          %518 = vmatpush.msra.mxu0 0.0
          %519 = vmatpush.msra.mxu0 0.0
          %520 = vmatpush.msra.mxu0 0.0
          %521 = vmatpush.msra.mxu0 0.0
          %522 = vmatpush.msra.mxu0 0.0
          %523 = vmatpush.msra.mxu0 0.0
          %524 = vmatpush.msra.mxu0 0.0
          %525 = vmatpush.msra.mxu0 0.0
          %526 = vmatpush.msra.mxu0 0.0
          %527 = vmatpush.msra.mxu0 0.0
          %528 = vmatpush.msra.mxu0 0.0
          %529 = vmatpush.msra.mxu0 %v505
          %530 = vmatmul.f32.gmra.mxu0 %v512
          %v531 = vpop.f32.mrf.mxu0
          %v532 = vadd.f32 0.0, %v531
          %533 = vdwg.mxu0
          %vm534 = vcmask 130048
          %535 = vst.msk [vmem:[%s402] sm:$0xff] %vm534, %v532
          %v536 = vld [vmem:[#allocation8] sm:$0xff]
          %v538 = vsel %vm510, %v536, 0
          %540 = vmatpush.msra.mxu0 0.0
          %541 = vmatpush.msra.mxu0 0.0
          %542 = vmatpush.msra.mxu0 0.0
          %543 = vmatpush.msra.mxu0 0.0
          %544 = vmatpush.msra.mxu0 0.0
          %545 = vmatpush.msra.mxu0 0.0
          %546 = vmatpush.msra.mxu0 0.0
          %547 = vmatpush.msra.mxu0 0.0
          %548 = vmatpush.msra.mxu0 0.0
          %549 = vmatpush.msra.mxu0 0.0
          %550 = vmatpush.msra.mxu0 0.0
          %551 = vmatpush.msra.mxu0 0.0
          %552 = vmatpush.msra.mxu0 0.0
          %553 = vmatpush.msra.mxu0 0.0
          %554 = vmatpush.msra.mxu0 0.0
          %555 = vmatpush.msra.mxu0 %v506
          %556 = vmatmul.f32.gmra.mxu0 %v538
          %v557 = vpop.f32.mrf.mxu0
          %v558 = vadd.f32 0.0, %v557
          %559 = vdwg.mxu0
          %s560 = scalar_lea.vmem %s402, 8 [#allocation12]
          %561 = vst.msk [vmem:[%s560] sm:$0xff] %vm534, %v558
          %v562 = vld [vmem:[#allocation8] sm:$0xff]
          %v564 = vsel %vm510, %v562, 0
          %566 = vmatpush.msra.mxu0 0.0
          %567 = vmatpush.msra.mxu0 0.0
          %568 = vmatpush.msra.mxu0 0.0
          %569 = vmatpush.msra.mxu0 0.0
          %570 = vmatpush.msra.mxu0 0.0
          %571 = vmatpush.msra.mxu0 0.0
          %572 = vmatpush.msra.mxu0 0.0
          %573 = vmatpush.msra.mxu0 0.0
          %574 = vmatpush.msra.mxu0 0.0
          %575 = vmatpush.msra.mxu0 0.0
          %576 = vmatpush.msra.mxu0 0.0
          %577 = vmatpush.msra.mxu0 0.0
          %578 = vmatpush.msra.mxu0 0.0
          %579 = vmatpush.msra.mxu0 0.0
          %580 = vmatpush.msra.mxu0 0.0
          %581 = vmatpush.msra.mxu0 %v507
          %582 = vmatmul.f32.gmra.mxu0 %v564
          %v583 = vpop.f32.mrf.mxu0
          %v584 = vadd.f32 0.0, %v583
          %585 = vdwg.mxu0
          %s586 = scalar_lea.vmem %s402, 16 [#allocation12]
          %587 = vst.msk [vmem:[%s586] sm:$0xff] %vm534, %v584
          %v588 = vld [vmem:[#allocation8] sm:$0xff]
          %v590 = vsel %vm510, %v588, 0
          %592 = vmatpush.msra.mxu0 0.0
          %593 = vmatpush.msra.mxu0 0.0
          %594 = vmatpush.msra.mxu0 0.0
          %595 = vmatpush.msra.mxu0 0.0
          %596 = vmatpush.msra.mxu0 0.0
          %597 = vmatpush.msra.mxu0 0.0
          %598 = vmatpush.msra.mxu0 0.0
          %599 = vmatpush.msra.mxu0 0.0
          %600 = vmatpush.msra.mxu0 0.0
          %601 = vmatpush.msra.mxu0 0.0
          %602 = vmatpush.msra.mxu0 0.0
          %603 = vmatpush.msra.mxu0 0.0
          %604 = vmatpush.msra.mxu0 0.0
          %605 = vmatpush.msra.mxu0 0.0
          %606 = vmatpush.msra.mxu0 0.0
          %607 = vmatpush.msra.mxu0 %v508
          %608 = vmatmul.f32.gmra.mxu0 %v590
          %v609 = vpop.f32.mrf.mxu0
          %v610 = vadd.f32 0.0, %v609
          %611 = vdwg.mxu0
          %s612 = scalar_lea.vmem %s402, 24 [#allocation12]
          %613 = vst.msk [vmem:[%s612] sm:$0xff] %vm534, %v610
        $region64: #{tpu_custom_call.1} parent=35 // pred_fallthru
          _
        %p614 = pnand %p427, %p429
        %p615 = pneg %p614
        // Predicated region
        $region65: #{tpu_custom_call.1} parent=35 // pred_check
          _
        $region66: #{tpu_custom_call.1} parent=35 // pred_check_branch
          %617 = sbr.rel (%p614) target = $region68
        $region67: #{tpu_custom_call.1} parent=35 // pred_region
          %v618 = vld [vmem:[%s362] sm:$0xff]
          %v619 = vld [vmem:[%s362 + $0x8] sm:$0xff]
          %v620 = vld [vmem:[%s362 + $0x10] sm:$0xff]
          %v621 = vld [vmem:[%s362 + $0x18] sm:$0xff]
          %v622 = vld [vmem:[#allocation5] sm:$0xff]
          %v623 = vld [vmem:[#allocation5 + $0x8] sm:$0xff]
          %v624 = vld [vmem:[#allocation8] sm:$0xff]
          %vm625 = vcmask 64512
          %v627 = vsel %vm625, %v624, 0
          %629 = vmatpush.msra.mxu0 0.0
          %630 = vmatpush.msra.mxu0 0.0
          %631 = vmatpush.msra.mxu0 0.0
          %632 = vmatpush.msra.mxu0 0.0
          %633 = vmatpush.msra.mxu0 0.0
          %634 = vmatpush.msra.mxu0 0.0
          %635 = vmatpush.msra.mxu0 0.0
          %636 = vmatpush.msra.mxu0 0.0
          %637 = vmatpush.msra.mxu0 0.0
          %638 = vmatpush.msra.mxu0 0.0
          %639 = vmatpush.msra.mxu0 0.0
          %640 = vmatpush.msra.mxu0 0.0
          %641 = vmatpush.msra.mxu0 0.0
          %642 = vmatpush.msra.mxu0 0.0
          %643 = vmatpush.msra.mxu0 0.0
          %644 = vmatpush.msra.mxu0 %v618
          %645 = vmatmul.f32.gmra.mxu0 %v627
          %v646 = vpop.f32.mrf.mxu0
          %v647 = vadd.f32 0.0, %v646
          %648 = vdwg.mxu0
          %vm649 = vcmask 130048
          %v651 = vsel %vm649, %v647, 0
          %653 = vmatpush.msra.mxu0 0.0
          %654 = vmatpush.msra.mxu0 0.0
          %655 = vmatpush.msra.mxu0 0.0
          %656 = vmatpush.msra.mxu0 0.0
          %657 = vmatpush.msra.mxu0 0.0
          %658 = vmatpush.msra.mxu0 0.0
          %659 = vmatpush.msra.mxu0 0.0
          %660 = vmatpush.msra.mxu0 0.0
          %661 = vmatpush.msra.mxu0 0.0
          %662 = vmatpush.msra.mxu0 0.0
          %663 = vmatpush.msra.mxu0 0.0
          %664 = vmatpush.msra.mxu0 0.0
          %665 = vmatpush.msra.mxu0 0.0
          %666 = vmatpush.msra.mxu0 0.0
          %667 = vmatpush.msra.mxu0 %v623
          %668 = vmatpush.msra.mxu0 %v622
          %669 = vmatmul.f32.gmra.mxu0 %v651
          %v670 = vpop.f32.mrf.mxu0
          %v671 = vadd.f32 0.0, %v670
          %672 = vdwg.mxu0
          %673 = vst.msk [vmem:[%s402] sm:$0xff] %vm649, %v671
          %v674 = vld [vmem:[#allocation8] sm:$0xff]
          %v676 = vsel %vm625, %v674, 0
          %678 = vmatpush.msra.mxu0 0.0
          %679 = vmatpush.msra.mxu0 0.0
          %680 = vmatpush.msra.mxu0 0.0
          %681 = vmatpush.msra.mxu0 0.0
          %682 = vmatpush.msra.mxu0 0.0
          %683 = vmatpush.msra.mxu0 0.0
          %684 = vmatpush.msra.mxu0 0.0
          %685 = vmatpush.msra.mxu0 0.0
          %686 = vmatpush.msra.mxu0 0.0
          %687 = vmatpush.msra.mxu0 0.0
          %688 = vmatpush.msra.mxu0 0.0
          %689 = vmatpush.msra.mxu0 0.0
          %690 = vmatpush.msra.mxu0 0.0
          %691 = vmatpush.msra.mxu0 0.0
          %692 = vmatpush.msra.mxu0 0.0
          %693 = vmatpush.msra.mxu0 %v619
          %694 = vmatmul.f32.gmra.mxu0 %v676
          %v695 = vpop.f32.mrf.mxu0
          %v696 = vadd.f32 0.0, %v695
          %697 = vdwg.mxu0
          %v699 = vsel %vm649, %v696, 0
          %701 = vmatpush.msra.mxu0 0.0
          %702 = vmatpush.msra.mxu0 0.0
          %703 = vmatpush.msra.mxu0 0.0
          %704 = vmatpush.msra.mxu0 0.0
          %705 = vmatpush.msra.mxu0 0.0
          %706 = vmatpush.msra.mxu0 0.0
          %707 = vmatpush.msra.mxu0 0.0
          %708 = vmatpush.msra.mxu0 0.0
          %709 = vmatpush.msra.mxu0 0.0
          %710 = vmatpush.msra.mxu0 0.0
          %711 = vmatpush.msra.mxu0 0.0
          %712 = vmatpush.msra.mxu0 0.0
          %713 = vmatpush.msra.mxu0 0.0
          %714 = vmatpush.msra.mxu0 0.0
          %715 = vmatpush.msra.mxu0 %v623
          %716 = vmatpush.msra.mxu0 %v622
          %717 = vmatmul.f32.gmra.mxu0 %v699
          %v718 = vpop.f32.mrf.mxu0
          %v719 = vadd.f32 0.0, %v718
          %720 = vdwg.mxu0
          %s721 = scalar_lea.vmem %s402, 8 [#allocation12]
          %722 = vst.msk [vmem:[%s721] sm:$0xff] %vm649, %v719
          %v723 = vld [vmem:[#allocation8] sm:$0xff]
          %v725 = vsel %vm625, %v723, 0
          %727 = vmatpush.msra.mxu0 0.0
          %728 = vmatpush.msra.mxu0 0.0
          %729 = vmatpush.msra.mxu0 0.0
          %730 = vmatpush.msra.mxu0 0.0
          %731 = vmatpush.msra.mxu0 0.0
          %732 = vmatpush.msra.mxu0 0.0
          %733 = vmatpush.msra.mxu0 0.0
          %734 = vmatpush.msra.mxu0 0.0
          %735 = vmatpush.msra.mxu0 0.0
          %736 = vmatpush.msra.mxu0 0.0
          %737 = vmatpush.msra.mxu0 0.0
          %738 = vmatpush.msra.mxu0 0.0
          %739 = vmatpush.msra.mxu0 0.0
          %740 = vmatpush.msra.mxu0 0.0
          %741 = vmatpush.msra.mxu0 0.0
          %742 = vmatpush.msra.mxu0 %v620
          %743 = vmatmul.f32.gmra.mxu0 %v725
          %v744 = vpop.f32.mrf.mxu0
          %v745 = vadd.f32 0.0, %v744
          %746 = vdwg.mxu0
          %v748 = vsel %vm649, %v745, 0
          %750 = vmatpush.msra.mxu0 0.0
          %751 = vmatpush.msra.mxu0 0.0
          %752 = vmatpush.msra.mxu0 0.0
          %753 = vmatpush.msra.mxu0 0.0
          %754 = vmatpush.msra.mxu0 0.0
          %755 = vmatpush.msra.mxu0 0.0
          %756 = vmatpush.msra.mxu0 0.0
          %757 = vmatpush.msra.mxu0 0.0
          %758 = vmatpush.msra.mxu0 0.0
          %759 = vmatpush.msra.mxu0 0.0
          %760 = vmatpush.msra.mxu0 0.0
          %761 = vmatpush.msra.mxu0 0.0
          %762 = vmatpush.msra.mxu0 0.0
          %763 = vmatpush.msra.mxu0 0.0
          %764 = vmatpush.msra.mxu0 %v623
          %765 = vmatpush.msra.mxu0 %v622
          %766 = vmatmul.f32.gmra.mxu0 %v748
          %v767 = vpop.f32.mrf.mxu0
          %v768 = vadd.f32 0.0, %v767
          %769 = vdwg.mxu0
          %s770 = scalar_lea.vmem %s402, 16 [#allocation12]
          %771 = vst.msk [vmem:[%s770] sm:$0xff] %vm649, %v768
          %v772 = vld [vmem:[#allocation8] sm:$0xff]
          %v774 = vsel %vm625, %v772, 0
          %776 = vmatpush.msra.mxu0 0.0
          %777 = vmatpush.msra.mxu0 0.0
          %778 = vmatpush.msra.mxu0 0.0
          %779 = vmatpush.msra.mxu0 0.0
          %780 = vmatpush.msra.mxu0 0.0
          %781 = vmatpush.msra.mxu0 0.0
          %782 = vmatpush.msra.mxu0 0.0
          %783 = vmatpush.msra.mxu0 0.0
          %784 = vmatpush.msra.mxu0 0.0
          %785 = vmatpush.msra.mxu0 0.0
          %786 = vmatpush.msra.mxu0 0.0
          %787 = vmatpush.msra.mxu0 0.0
          %788 = vmatpush.msra.mxu0 0.0
          %789 = vmatpush.msra.mxu0 0.0
          %790 = vmatpush.msra.mxu0 0.0
          %791 = vmatpush.msra.mxu0 %v621
          %792 = vmatmul.f32.gmra.mxu0 %v774
          %v793 = vpop.f32.mrf.mxu0
          %v794 = vadd.f32 0.0, %v793
          %795 = vdwg.mxu0
          %v797 = vsel %vm649, %v794, 0
          %799 = vmatpush.msra.mxu0 0.0
          %800 = vmatpush.msra.mxu0 0.0
          %801 = vmatpush.msra.mxu0 0.0
          %802 = vmatpush.msra.mxu0 0.0
          %803 = vmatpush.msra.mxu0 0.0
          %804 = vmatpush.msra.mxu0 0.0
          %805 = vmatpush.msra.mxu0 0.0
          %806 = vmatpush.msra.mxu0 0.0
          %807 = vmatpush.msra.mxu0 0.0
          %808 = vmatpush.msra.mxu0 0.0
          %809 = vmatpush.msra.mxu0 0.0
          %810 = vmatpush.msra.mxu0 0.0
          %811 = vmatpush.msra.mxu0 0.0
          %812 = vmatpush.msra.mxu0 0.0
          %813 = vmatpush.msra.mxu0 %v623
          %814 = vmatpush.msra.mxu0 %v622
          %815 = vmatmul.f32.gmra.mxu0 %v797
          %v816 = vpop.f32.mrf.mxu0
          %v817 = vadd.f32 0.0, %v816
          %818 = vdwg.mxu0
          %s819 = scalar_lea.vmem %s402, 24 [#allocation12]
          %820 = vst.msk [vmem:[%s819] sm:$0xff] %vm649, %v817
        $region68: #{tpu_custom_call.1} parent=35 // pred_fallthru
          _
        // Predicated region
        $region69: #{tpu_custom_call.1} parent=35 // pred_check
          _
        $region70: #{tpu_custom_call.1} parent=35 // pred_check_branch
          %822 = sbr.rel (%p432) target = $region72
        $region71: #{tpu_custom_call.1} parent=35 // pred_region
          %v823 = vld [vmem:[%s372] sm:$0xff]
          %v824 = vld [vmem:[%s372 + $0x8] sm:$0xff]
          %v825 = vld [vmem:[%s372 + $0x10] sm:$0xff]
          %v826 = vld [vmem:[%s372 + $0x18] sm:$0xff]
          %vm827 = vcmask 130048
          %828 = vst.msk [vmem:[%s409] sm:$0xff] %vm827, %v823
          %829 = vst.msk [vmem:[%s409 + $0x8] sm:$0xff] %vm827, %v824
          %830 = vst.msk [vmem:[%s409 + $0x10] sm:$0xff] %vm827, %v825
          %831 = vst.msk [vmem:[%s409 + $0x18] sm:$0xff] %vm827, %v826
        $region72: #{tpu_custom_call.1} parent=35 // pred_fallthru
          _
        // Predicated region
        $region73: #{tpu_custom_call.1} parent=35 // pred_check
          _
        $region74: #{tpu_custom_call.1} parent=35 // pred_check_branch
          %833 = sbr.rel (%p445) target = $region76
        $region75: #{tpu_custom_call.1} parent=35 // pred_region
          %v834 = vld [vmem:[%s372] sm:$0xff]
          %v835 = vld [vmem:[%s372 + $0x8] sm:$0xff]
          %v836 = vld [vmem:[%s372 + $0x10] sm:$0xff]
          %v837 = vld [vmem:[%s372 + $0x18] sm:$0xff]
          %v838 = vld [vmem:[#allocation5] sm:$0xff]
          %v839 = vld [vmem:[#allocation5 + $0x8] sm:$0xff]
          %vm840 = vcmask 130048
          %v842 = vsel %vm840, %v834, 0
          %v845 = vsel %vm840, %v835, 0
          %v848 = vsel %vm840, %v836, 0
          %v851 = vsel %vm840, %v837, 0
          %853 = vmatpush.msra.mxu0 0.0
          %854 = vmatpush.msra.mxu0 0.0
          %855 = vmatpush.msra.mxu0 0.0
          %856 = vmatpush.msra.mxu0 0.0
          %857 = vmatpush.msra.mxu0 0.0
          %858 = vmatpush.msra.mxu0 0.0
          %859 = vmatpush.msra.mxu0 0.0
          %860 = vmatpush.msra.mxu0 0.0
          %861 = vmatpush.msra.mxu0 0.0
          %862 = vmatpush.msra.mxu0 0.0
          %863 = vmatpush.msra.mxu0 0.0
          %864 = vmatpush.msra.mxu0 0.0
          %865 = vmatpush.msra.mxu0 0.0
          %866 = vmatpush.msra.mxu0 0.0
          %867 = vmatpush.msra.mxu0 %v839
          %868 = vmatpush.msra.mxu0 %v838
          %869 = vmatmul.f32.gmra.mxu0 %v842
          %v870 = vpop.f32.mrf.mxu0
          %v871 = vadd.f32 0.0, %v870
          %872 = vmatmul.f32.gmra.mxu0 %v845
          %v873 = vpop.f32.mrf.mxu0
          %v874 = vadd.f32 0.0, %v873
          %875 = vmatmul.f32.gmra.mxu0 %v848
          %v876 = vpop.f32.mrf.mxu0
          %v877 = vadd.f32 0.0, %v876
          %878 = vmatmul.f32.gmra.mxu0 %v851
          %v879 = vpop.f32.mrf.mxu0
          %v880 = vadd.f32 0.0, %v879
          %881 = vdwg.mxu0
          %882 = vst.msk [vmem:[%s409] sm:$0xff] %vm840, %v871
          %883 = vst.msk [vmem:[%s409 + $0x8] sm:$0xff] %vm840, %v874
          %884 = vst.msk [vmem:[%s409 + $0x10] sm:$0xff] %vm840, %v877
          %885 = vst.msk [vmem:[%s409 + $0x18] sm:$0xff] %vm840, %v880
        $region76: #{tpu_custom_call.1} parent=35 // pred_fallthru
          _
        // Predicated region
        $region77: #{tpu_custom_call.1} parent=35 // pred_check
          _
        $region78: #{tpu_custom_call.1} parent=35 // pred_check_branch
          %887 = sbr.rel (%p501) target = $region80
        $region79: #{tpu_custom_call.1} parent=35 // pred_region
          %v888 = vld [vmem:[%s372] sm:$0xff]
          %v889 = vld [vmem:[%s372 + $0x8] sm:$0xff]
          %v890 = vld [vmem:[%s372 + $0x10] sm:$0xff]
          %v891 = vld [vmem:[%s372 + $0x18] sm:$0xff]
          %v892 = vld [vmem:[#allocation8] sm:$0xff]
          %vm893 = vcmask 64512
          %v895 = vsel %vm893, %v892, 0
          %897 = vmatpush.msra.mxu0 0.0
          %898 = vmatpush.msra.mxu0 0.0
          %899 = vmatpush.msra.mxu0 0.0
          %900 = vmatpush.msra.mxu0 0.0
          %901 = vmatpush.msra.mxu0 0.0
          %902 = vmatpush.msra.mxu0 0.0
          %903 = vmatpush.msra.mxu0 0.0
          %904 = vmatpush.msra.mxu0 0.0
          %905 = vmatpush.msra.mxu0 0.0
          %906 = vmatpush.msra.mxu0 0.0
          %907 = vmatpush.msra.mxu0 0.0
          %908 = vmatpush.msra.mxu0 0.0
          %909 = vmatpush.msra.mxu0 0.0
          %910 = vmatpush.msra.mxu0 0.0
          %911 = vmatpush.msra.mxu0 0.0
          %912 = vmatpush.msra.mxu0 %v888
          %913 = vmatmul.f32.gmra.mxu0 %v895
          %v914 = vpop.f32.mrf.mxu0
          %v915 = vadd.f32 0.0, %v914
          %916 = vdwg.mxu0
          %vm917 = vcmask 130048
          %918 = vst.msk [vmem:[%s409] sm:$0xff] %vm917, %v915
          %v919 = vld [vmem:[#allocation8] sm:$0xff]
          %v921 = vsel %vm893, %v919, 0
          %923 = vmatpush.msra.mxu0 0.0
          %924 = vmatpush.msra.mxu0 0.0
          %925 = vmatpush.msra.mxu0 0.0
          %926 = vmatpush.msra.mxu0 0.0
          %927 = vmatpush.msra.mxu0 0.0
          %928 = vmatpush.msra.mxu0 0.0
          %929 = vmatpush.msra.mxu0 0.0
          %930 = vmatpush.msra.mxu0 0.0
          %931 = vmatpush.msra.mxu0 0.0
          %932 = vmatpush.msra.mxu0 0.0
          %933 = vmatpush.msra.mxu0 0.0
          %934 = vmatpush.msra.mxu0 0.0
          %935 = vmatpush.msra.mxu0 0.0
          %936 = vmatpush.msra.mxu0 0.0
          %937 = vmatpush.msra.mxu0 0.0
          %938 = vmatpush.msra.mxu0 %v889
          %939 = vmatmul.f32.gmra.mxu0 %v921
          %v940 = vpop.f32.mrf.mxu0
          %v941 = vadd.f32 0.0, %v940
          %942 = vdwg.mxu0
          %s943 = scalar_lea.vmem %s409, 8 [#allocation13]
          %944 = vst.msk [vmem:[%s943] sm:$0xff] %vm917, %v941
          %v945 = vld [vmem:[#allocation8] sm:$0xff]
          %v947 = vsel %vm893, %v945, 0
          %949 = vmatpush.msra.mxu0 0.0
          %950 = vmatpush.msra.mxu0 0.0
          %951 = vmatpush.msra.mxu0 0.0
          %952 = vmatpush.msra.mxu0 0.0
          %953 = vmatpush.msra.mxu0 0.0
          %954 = vmatpush.msra.mxu0 0.0
          %955 = vmatpush.msra.mxu0 0.0
          %956 = vmatpush.msra.mxu0 0.0
          %957 = vmatpush.msra.mxu0 0.0
          %958 = vmatpush.msra.mxu0 0.0
          %959 = vmatpush.msra.mxu0 0.0
          %960 = vmatpush.msra.mxu0 0.0
          %961 = vmatpush.msra.mxu0 0.0
          %962 = vmatpush.msra.mxu0 0.0
          %963 = vmatpush.msra.mxu0 0.0
          %964 = vmatpush.msra.mxu0 %v890
          %965 = vmatmul.f32.gmra.mxu0 %v947
          %v966 = vpop.f32.mrf.mxu0
          %v967 = vadd.f32 0.0, %v966
          %968 = vdwg.mxu0
          %s969 = scalar_lea.vmem %s409, 16 [#allocation13]
          %970 = vst.msk [vmem:[%s969] sm:$0xff] %vm917, %v967
          %v971 = vld [vmem:[#allocation8] sm:$0xff]
          %v973 = vsel %vm893, %v971, 0
          %975 = vmatpush.msra.mxu0 0.0
          %976 = vmatpush.msra.mxu0 0.0
          %977 = vmatpush.msra.mxu0 0.0
          %978 = vmatpush.msra.mxu0 0.0
          %979 = vmatpush.msra.mxu0 0.0
          %980 = vmatpush.msra.mxu0 0.0
          %981 = vmatpush.msra.mxu0 0.0
          %982 = vmatpush.msra.mxu0 0.0
          %983 = vmatpush.msra.mxu0 0.0
          %984 = vmatpush.msra.mxu0 0.0
          %985 = vmatpush.msra.mxu0 0.0
          %986 = vmatpush.msra.mxu0 0.0
          %987 = vmatpush.msra.mxu0 0.0
          %988 = vmatpush.msra.mxu0 0.0
          %989 = vmatpush.msra.mxu0 0.0
          %990 = vmatpush.msra.mxu0 %v891
          %991 = vmatmul.f32.gmra.mxu0 %v973
          %v992 = vpop.f32.mrf.mxu0
          %v993 = vadd.f32 0.0, %v992
          %994 = vdwg.mxu0
          %s995 = scalar_lea.vmem %s409, 24 [#allocation13]
          %996 = vst.msk [vmem:[%s995] sm:$0xff] %vm917, %v993
        $region80: #{tpu_custom_call.1} parent=35 // pred_fallthru
          _
        // Predicated region
        $region81: #{tpu_custom_call.1} parent=35 // pred_check
          _
        $region82: #{tpu_custom_call.1} parent=35 // pred_check_branch
          %998 = sbr.rel (%p614) target = $region84
        $region83: #{tpu_custom_call.1} parent=35 // pred_region
          %v999 = vld [vmem:[%s372] sm:$0xff]
          %v1000 = vld [vmem:[%s372 + $0x8] sm:$0xff]
          %v1001 = vld [vmem:[%s372 + $0x10] sm:$0xff]
          %v1002 = vld [vmem:[%s372 + $0x18] sm:$0xff]
          %v1003 = vld [vmem:[#allocation5] sm:$0xff]
          %v1004 = vld [vmem:[#allocation5 + $0x8] sm:$0xff]
          %v1005 = vld [vmem:[#allocation8] sm:$0xff]
          %vm1006 = vcmask 64512
          %v1008 = vsel %vm1006, %v1005, 0
          %1010 = vmatpush.msra.mxu0 0.0
          %1011 = vmatpush.msra.mxu0 0.0
          %1012 = vmatpush.msra.mxu0 0.0
          %1013 = vmatpush.msra.mxu0 0.0
          %1014 = vmatpush.msra.mxu0 0.0
          %1015 = vmatpush.msra.mxu0 0.0
          %1016 = vmatpush.msra.mxu0 0.0
          %1017 = vmatpush.msra.mxu0 0.0
          %1018 = vmatpush.msra.mxu0 0.0
          %1019 = vmatpush.msra.mxu0 0.0
          %1020 = vmatpush.msra.mxu0 0.0
          %1021 = vmatpush.msra.mxu0 0.0
          %1022 = vmatpush.msra.mxu0 0.0
          %1023 = vmatpush.msra.mxu0 0.0
          %1024 = vmatpush.msra.mxu0 0.0
          %1025 = vmatpush.msra.mxu0 %v999
          %1026 = vmatmul.f32.gmra.mxu0 %v1008
          %v1027 = vpop.f32.mrf.mxu0
          %v1028 = vadd.f32 0.0, %v1027
          %1029 = vdwg.mxu0
          %vm1030 = vcmask 130048
          %v1032 = vsel %vm1030, %v1028, 0
          %1034 = vmatpush.msra.mxu0 0.0
          %1035 = vmatpush.msra.mxu0 0.0
          %1036 = vmatpush.msra.mxu0 0.0
          %1037 = vmatpush.msra.mxu0 0.0
          %1038 = vmatpush.msra.mxu0 0.0
          %1039 = vmatpush.msra.mxu0 0.0
          %1040 = vmatpush.msra.mxu0 0.0
          %1041 = vmatpush.msra.mxu0 0.0
          %1042 = vmatpush.msra.mxu0 0.0
          %1043 = vmatpush.msra.mxu0 0.0
          %1044 = vmatpush.msra.mxu0 0.0
          %1045 = vmatpush.msra.mxu0 0.0
          %1046 = vmatpush.msra.mxu0 0.0
          %1047 = vmatpush.msra.mxu0 0.0
          %1048 = vmatpush.msra.mxu0 %v1004
          %1049 = vmatpush.msra.mxu0 %v1003
          %1050 = vmatmul.f32.gmra.mxu0 %v1032
          %v1051 = vpop.f32.mrf.mxu0
          %v1052 = vadd.f32 0.0, %v1051
          %1053 = vdwg.mxu0
          %1054 = vst.msk [vmem:[%s409] sm:$0xff] %vm1030, %v1052
          %v1055 = vld [vmem:[#allocation8] sm:$0xff]
          %v1057 = vsel %vm1006, %v1055, 0
          %1059 = vmatpush.msra.mxu0 0.0
          %1060 = vmatpush.msra.mxu0 0.0
          %1061 = vmatpush.msra.mxu0 0.0
          %1062 = vmatpush.msra.mxu0 0.0
          %1063 = vmatpush.msra.mxu0 0.0
          %1064 = vmatpush.msra.mxu0 0.0
          %1065 = vmatpush.msra.mxu0 0.0
          %1066 = vmatpush.msra.mxu0 0.0
          %1067 = vmatpush.msra.mxu0 0.0
          %1068 = vmatpush.msra.mxu0 0.0
          %1069 = vmatpush.msra.mxu0 0.0
          %1070 = vmatpush.msra.mxu0 0.0
          %1071 = vmatpush.msra.mxu0 0.0
          %1072 = vmatpush.msra.mxu0 0.0
          %1073 = vmatpush.msra.mxu0 0.0
          %1074 = vmatpush.msra.mxu0 %v1000
          %1075 = vmatmul.f32.gmra.mxu0 %v1057
          %v1076 = vpop.f32.mrf.mxu0
          %v1077 = vadd.f32 0.0, %v1076
          %1078 = vdwg.mxu0
          %v1080 = vsel %vm1030, %v1077, 0
          %1082 = vmatpush.msra.mxu0 0.0
          %1083 = vmatpush.msra.mxu0 0.0
          %1084 = vmatpush.msra.mxu0 0.0
          %1085 = vmatpush.msra.mxu0 0.0
          %1086 = vmatpush.msra.mxu0 0.0
          %1087 = vmatpush.msra.mxu0 0.0
          %1088 = vmatpush.msra.mxu0 0.0
          %1089 = vmatpush.msra.mxu0 0.0
          %1090 = vmatpush.msra.mxu0 0.0
          %1091 = vmatpush.msra.mxu0 0.0
          %1092 = vmatpush.msra.mxu0 0.0
          %1093 = vmatpush.msra.mxu0 0.0
          %1094 = vmatpush.msra.mxu0 0.0
          %1095 = vmatpush.msra.mxu0 0.0
          %1096 = vmatpush.msra.mxu0 %v1004
          %1097 = vmatpush.msra.mxu0 %v1003
          %1098 = vmatmul.f32.gmra.mxu0 %v1080
          %v1099 = vpop.f32.mrf.mxu0
          %v1100 = vadd.f32 0.0, %v1099
          %1101 = vdwg.mxu0
          %s1102 = scalar_lea.vmem %s409, 8 [#allocation13]
          %1103 = vst.msk [vmem:[%s1102] sm:$0xff] %vm1030, %v1100
          %v1104 = vld [vmem:[#allocation8] sm:$0xff]
          %v1106 = vsel %vm1006, %v1104, 0
          %1108 = vmatpush.msra.mxu0 0.0
          %1109 = vmatpush.msra.mxu0 0.0
          %1110 = vmatpush.msra.mxu0 0.0
          %1111 = vmatpush.msra.mxu0 0.0
          %1112 = vmatpush.msra.mxu0 0.0
          %1113 = vmatpush.msra.mxu0 0.0
          %1114 = vmatpush.msra.mxu0 0.0
          %1115 = vmatpush.msra.mxu0 0.0
          %1116 = vmatpush.msra.mxu0 0.0
          %1117 = vmatpush.msra.mxu0 0.0
          %1118 = vmatpush.msra.mxu0 0.0
          %1119 = vmatpush.msra.mxu0 0.0
          %1120 = vmatpush.msra.mxu0 0.0
          %1121 = vmatpush.msra.mxu0 0.0
          %1122 = vmatpush.msra.mxu0 0.0
          %1123 = vmatpush.msra.mxu0 %v1001
          %1124 = vmatmul.f32.gmra.mxu0 %v1106
          %v1125 = vpop.f32.mrf.mxu0
          %v1126 = vadd.f32 0.0, %v1125
          %1127 = vdwg.mxu0
          %v1129 = vsel %vm1030, %v1126, 0
          %1131 = vmatpush.msra.mxu0 0.0
          %1132 = vmatpush.msra.mxu0 0.0
          %1133 = vmatpush.msra.mxu0 0.0
          %1134 = vmatpush.msra.mxu0 0.0
          %1135 = vmatpush.msra.mxu0 0.0
          %1136 = vmatpush.msra.mxu0 0.0
          %1137 = vmatpush.msra.mxu0 0.0
          %1138 = vmatpush.msra.mxu0 0.0
          %1139 = vmatpush.msra.mxu0 0.0
          %1140 = vmatpush.msra.mxu0 0.0
          %1141 = vmatpush.msra.mxu0 0.0
          %1142 = vmatpush.msra.mxu0 0.0
          %1143 = vmatpush.msra.mxu0 0.0
          %1144 = vmatpush.msra.mxu0 0.0
          %1145 = vmatpush.msra.mxu0 %v1004
          %1146 = vmatpush.msra.mxu0 %v1003
          %1147 = vmatmul.f32.gmra.mxu0 %v1129
          %v1148 = vpop.f32.mrf.mxu0
          %v1149 = vadd.f32 0.0, %v1148
          %1150 = vdwg.mxu0
          %s1151 = scalar_lea.vmem %s409, 16 [#allocation13]
          %1152 = vst.msk [vmem:[%s1151] sm:$0xff] %vm1030, %v1149
          %v1153 = vld [vmem:[#allocation8] sm:$0xff]
          %v1155 = vsel %vm1006, %v1153, 0
          %1157 = vmatpush.msra.mxu0 0.0
          %1158 = vmatpush.msra.mxu0 0.0
          %1159 = vmatpush.msra.mxu0 0.0
          %1160 = vmatpush.msra.mxu0 0.0
          %1161 = vmatpush.msra.mxu0 0.0
          %1162 = vmatpush.msra.mxu0 0.0
          %1163 = vmatpush.msra.mxu0 0.0
          %1164 = vmatpush.msra.mxu0 0.0
          %1165 = vmatpush.msra.mxu0 0.0
          %1166 = vmatpush.msra.mxu0 0.0
          %1167 = vmatpush.msra.mxu0 0.0
          %1168 = vmatpush.msra.mxu0 0.0
          %1169 = vmatpush.msra.mxu0 0.0
          %1170 = vmatpush.msra.mxu0 0.0
          %1171 = vmatpush.msra.mxu0 0.0
          %1172 = vmatpush.msra.mxu0 %v1002
          %1173 = vmatmul.f32.gmra.mxu0 %v1155
          %v1174 = vpop.f32.mrf.mxu0
          %v1175 = vadd.f32 0.0, %v1174
          %1176 = vdwg.mxu0
          %v1178 = vsel %vm1030, %v1175, 0
          %1180 = vmatpush.msra.mxu0 0.0
          %1181 = vmatpush.msra.mxu0 0.0
          %1182 = vmatpush.msra.mxu0 0.0
          %1183 = vmatpush.msra.mxu0 0.0
          %1184 = vmatpush.msra.mxu0 0.0
          %1185 = vmatpush.msra.mxu0 0.0
          %1186 = vmatpush.msra.mxu0 0.0
          %1187 = vmatpush.msra.mxu0 0.0
          %1188 = vmatpush.msra.mxu0 0.0
          %1189 = vmatpush.msra.mxu0 0.0
          %1190 = vmatpush.msra.mxu0 0.0
          %1191 = vmatpush.msra.mxu0 0.0
          %1192 = vmatpush.msra.mxu0 0.0
          %1193 = vmatpush.msra.mxu0 0.0
          %1194 = vmatpush.msra.mxu0 %v1004
          %1195 = vmatpush.msra.mxu0 %v1003
          %1196 = vmatmul.f32.gmra.mxu0 %v1178
          %v1197 = vpop.f32.mrf.mxu0
          %v1198 = vadd.f32 0.0, %v1197
          %1199 = vdwg.mxu0
          %s1200 = scalar_lea.vmem %s409, 24 [#allocation13]
          %1201 = vst.msk [vmem:[%s1200] sm:$0xff] %vm1030, %v1198
        $region84: #{tpu_custom_call.1} parent=35 // pred_fallthru
          _
        %s1202 = sand.u32 %s189, 1
        %s1203 = scalar_lea.sflag [#allocation7], %s1202
        %s1204 = sand.u32 %s189, 1
        %s1205 = smul.addr %s1204, 32
        %s1206 = scalar_lea.vmem [#allocation12], %s1205
        %s1207 = sand.u32 %s235, 1
        %s1208 = scalar_lea.sflag [#allocation14], %s1207
        %s1209 = sand.u32 %s235, 1
        %s1210 = smul.addr %s1209, 32
        %s1211 = scalar_lea.vmem [#allocation13], %s1210
        // Predicated region
        $region85: #{tpu_custom_call.1} parent=35 // pred_check
          %p1212 = pneg %p199
        $region86: #{tpu_custom_call.1} parent=35 // pred_check_branch
          %1214 = sbr.rel (%p1212) target = $region88
        $region87: #{tpu_custom_call.1} parent=35 // pred_region
          %s1215 = sld [smem:[#allocation4 + %s45]]
          %p1216 = scmp.ne.s32.totalorder %s1215, 0
          %s1217 = ssub.s32 1, %s46
          %s1218 = scalar_select %p1216, %s1217, %s46
          %s1219 = sld [smem:[#allocation3 + %s45]]
          %p1220 = scmp.ne.s32.totalorder %s1219, 0
          %s1221 = ssub.s32 0, %s47
          %s1222 = scalar_select %p1220, %s1221, %s47
          %1224 = vsyncadd %s1203, 0
          %s1225 = sadd.s32 %s1222, %s1218
          %s1226 = smul.addr %s45, 8
          %s1227 = sadd.s32 %s1225, %s1226
          %s1228 = smul.addr %s1227, 8
          %s1229 = scalar_lea.hbm %s6, %s1228
          %s1230 = sshll.u32 %s1206, 4
          %s1231 = int_to_ptr.vmem [resolvable:$true] %s1230
          %s1232 = sshll.u32 %s1229, 4
          %s1233 = int_to_ptr.hbm [resolvable:$true] %s1232
          %1238 = dma.vmem_to_hbm [thread:$0]  %s1231, 512, %s1233, %s1203, 128, 256, 8
        $region88: #{tpu_custom_call.1} parent=35 // pred_fallthru
          _
        // Predicated region
        $region89: #{tpu_custom_call.1} parent=35 // pred_check
          %p1239 = pneg %p245
        $region90: #{tpu_custom_call.1} parent=35 // pred_check_branch
          %1241 = sbr.rel (%p1239) target = $region92
        $region91: #{tpu_custom_call.1} parent=35 // pred_region
          %s1242 = sld [smem:[#allocation4 + %s45]]
          %p1243 = scmp.ne.s32.totalorder %s1242, 0
          %s1244 = ssub.s32 1, %s46
          %s1245 = scalar_select %p1243, %s1244, %s46
          %s1246 = sld [smem:[#allocation3 + %s45]]
          %p1247 = scmp.ne.s32.totalorder %s1246, 0
          %s1248 = ssub.s32 0, %s47
          %s1249 = scalar_select %p1247, %s1248, %s47
          %1251 = vsyncadd %s1208, 0
          %s1252 = sadd.s32 %s1249, %s1245
          %s1253 = smul.addr %s45, 8
          %s1254 = sadd.s32 %s1252, %s1253
          %s1255 = smul.addr %s1254, 8
          %s1256 = scalar_lea.hbm %s7, %s1255
          %s1257 = sshll.u32 %s1211, 4
          %s1258 = int_to_ptr.vmem [resolvable:$true] %s1257
          %s1259 = sshll.u32 %s1256, 4
          %s1260 = int_to_ptr.hbm [resolvable:$true] %s1259
          %1265 = dma.vmem_to_hbm [thread:$0]  %s1258, 512, %s1260, %s1208, 128, 256, 8
        $region92: #{tpu_custom_call.1} parent=35 // pred_fallthru
          _
      $region36: #{tpu_custom_call.1} parent=5 // pred_fallthru
        _
      %p1266 = scmp.le.s32.totalorder 2, %s35
      // Predicated region
      $region93: #{tpu_custom_call.1} parent=5 // pred_check
        %p1267 = pneg %p1266
      $region94: #{tpu_custom_call.1} parent=5 // pred_check_branch
        %1269 = sbr.rel (%p1267) target = $region96
      $region95: #{tpu_custom_call.1} parent=5 // pred_region
        %s1270 = ssub.s32 %s35, 2
        // Predicated region
        $region97: #{tpu_custom_call.1} parent=95 // pred_check
          %p1271 = pneg %p205
        $region98: #{tpu_custom_call.1} parent=95 // pred_check_branch
          %1273 = sbr.rel (%p1271) target = $region100
        $region99: #{tpu_custom_call.1} parent=95 // pred_region
          %s1274 = sand.u32 %s190, 1
          %s1275 = scalar_lea.sflag [#allocation7], %s1274
          %s1276 = sand.u32 %s190, 1
          %s1277 = smul.addr %s1276, 32
          %s1278 = scalar_lea.vmem [#allocation12], %s1277
          %1280 = dma.done %s1275, 512
        $region100: #{tpu_custom_call.1} parent=95 // pred_fallthru
          _
        // Predicated region
        $region101: #{tpu_custom_call.1} parent=95 // pred_check
          %p1281 = pneg %p251
        $region102: #{tpu_custom_call.1} parent=95 // pred_check_branch
          %1283 = sbr.rel (%p1281) target = $region104
        $region103: #{tpu_custom_call.1} parent=95 // pred_region
          %s1284 = sand.u32 %s236, 1
          %s1285 = scalar_lea.sflag [#allocation14], %s1284
          %s1286 = sand.u32 %s236, 1
          %s1287 = smul.addr %s1286, 32
          %s1288 = scalar_lea.vmem [#allocation13], %s1287
          %1290 = dma.done %s1285, 512
        $region104: #{tpu_custom_call.1} parent=95 // pred_fallthru
          _
      $region96: #{tpu_custom_call.1} parent=5 // pred_fallthru
        _
    $region6: #{tpu_custom_call.1} parent=1 // loop_footer
      %s39 = sadd.s32 1, %s35
    $region7: #{tpu_custom_call.1} parent=1 // loop_footer_branch
      %34 = sbr.rel target = $region3
    $region8: #{tpu_custom_call.1} parent=1 // loop_exit
      _
    %1291 = vsyncpa [#allocation6], 1
    %s1292 = scalar_lea.sflag [#allocation6], 1
    %1293 = vsyncpa %s1292, 1
    %1294 = vsyncpa [#allocation9], 1
    %1295 = vsyncpa [#allocation7], 1
    %s1296 = scalar_lea.sflag [#allocation7], 1
    %1297 = vsyncpa %s1296, 1
    %1298 = vsyncpa [#allocation14], 1
    %s1299 = scalar_lea.sflag [#allocation14], 1
    %1300 = vsyncpa %s1299, 1

</llo_original>
